<compile_context>
chip_gen: v7x
topology: tpu7x:2x2x1
jax: 0.10.0
libtpu: 0.0.40
codegen_flags: <defaults>
</compile_context>

<pallas_src>
import numpy as np
import jax
import jax.numpy as jnp
from jax.experimental import pallas as pl
from jax.experimental.pallas import tpu as pltpu


N_LAYERS = 3
LANE = 128
MAX_TM = 512        # row-tile cap      (int8 adjacency tile rows)
MAX_TK = 2048       # contraction cap   (int8 adjacency tile cols)
SCORE_TB = 128      # (user, item) pairs scored per grid step (lane width)


def _round_up(x, m):
    return (x + m - 1) // m * m


def _pad2(x, rows, cols):
    r, c = x.shape
    return jnp.pad(x, ((0, rows - r), (0, cols - c)))


def _pick_tile(n_pad, cap):
    """Largest multiple of 128 that divides n_pad and is <= cap."""
    for cand in (2048, 1024, 512, 256, 128):
        if cand <= cap and n_pad % cand == 0:
            return cand
    return LANE


# --------------------- kernel 1: tiled (int8 A) @ E matmul --------------------

def _ae_matmul_kernel(a_ref, e_ref, dis_ref, out_ref, nxt_ref):
    k = pl.program_id(1)

    @pl.when(k == 0)
    def _():
        out_ref[...] = jnp.zeros_like(out_ref)

    # int8 {0,1} adjacency tile -> bf16 on the VPU; bf16 x bf16 -> f32 on MXU.
    a_bf16 = a_ref[...].astype(jnp.float32).astype(jnp.bfloat16)
    out_ref[...] += jnp.dot(a_bf16, e_ref[...],
                            preferred_element_type=jnp.float32)

    @pl.when(k == pl.num_programs(1) - 1)
    def _():
        scale = dis_ref[...]                      # (tm, 1) = d_i^{-1/2}
        res = out_ref[...] * scale                # this layer's E^(l) rows (f32)
        out_ref[...] = res
        # Fused next-layer input: D^{-1/2} * E^(l), downcast to bf16.
        nxt_ref[...] = (res * scale).astype(nxt_ref.dtype)


def _ae_matmul(adj_i8, e_scaled, dis_col, *, tm, tk):
    """adj_i8: [N,N] int8 binary; e_scaled: [N,d] bf16 (rows pre-scaled by d^-1/2);
    dis_col: [N,1] f32 -> (E_layer f32 [N,d], next-layer bf16 input [N,d])."""
    n_pad = adj_i8.shape[0]
    d_pad = e_scaled.shape[1]
    flops = 2 * n_pad * n_pad * d_pad
    bytes_accessed = (n_pad * n_pad                               # int8 adjacency stream
                      + (n_pad // tm) * n_pad * d_pad * 2         # bf16 E re-streamed per row tile
                      + n_pad * d_pad * (4 + 2)                   # f32 result + bf16 next input
                      + n_pad * 4)                                # degree scales
    return pl.pallas_call(
        _ae_matmul_kernel,
        out_shape=(jax.ShapeDtypeStruct((n_pad, d_pad), jnp.float32),
                   jax.ShapeDtypeStruct((n_pad, d_pad), jnp.bfloat16)),
        grid_spec=pltpu.PrefetchScalarGridSpec(
            num_scalar_prefetch=0,
            grid=(n_pad // tm, n_pad // tk),
            in_specs=[
                pl.BlockSpec((tm, tk), lambda i, k: (i, k)),      # int8 adjacency tile
                pl.BlockSpec((tk, d_pad), lambda i, k: (k, 0)),   # pre-scaled E tile
                pl.BlockSpec((tm, 1), lambda i, k: (i, 0)),       # d_i^{-1/2} column
            ],
            out_specs=[
                pl.BlockSpec((tm, d_pad), lambda i, k: (i, 0)),   # f32 layer result (accumulator)
                pl.BlockSpec((tm, d_pad), lambda i, k: (i, 0)),   # bf16 next-layer input
            ],
        ),
        compiler_params=pltpu.CompilerParams(
            dimension_semantics=("parallel", "arbitrary")),
        cost_estimate=pl.CostEstimate(
            flops=flops, transcendentals=0, bytes_accessed=bytes_accessed),
    )(adj_i8, e_scaled, dis_col)


# ----------------------- static (once-per-graph) preparation ------------------

def lightgcn_prepare(interactions):
    """Hoisted out of the jitted forward: build the padded int8 binary adjacency
    and d^{-1/2} column once (redoing the O(N^2) pad+cast per call costs about
    one propagation layer of HBM traffic)."""
    n_users, n_items = interactions.shape
    n = n_users + n_items
    n_pad = _round_up(n, LANE)                    # pad to 128 only, not to tile

    a = jnp.zeros((n, n), dtype=jnp.float32)
    a = a.at[:n_users, n_users:].set(interactions)
    a = a.at[n_users:, :n_users].set(interactions.T)
    deg = jnp.sum(a, axis=1)
    d_inv_sqrt = jnp.where(deg > 0, 1.0 / jnp.sqrt(jnp.maximum(deg, 1e-12)), 0.0)

    adj_i8 = _pad2(a, n_pad, n_pad).astype(jnp.int8)          # exact {0,1}
    dis_col = jnp.pad(d_inv_sqrt, (0, n_pad - n)).reshape(n_pad, 1).astype(jnp.float32)
    return adj_i8, dis_col


def lightgcn_propagate(adj_i8, dis_col, e0, *, n_layers=N_LAYERS):
    """adj_i8: [N_pad,N_pad] int8, dis_col: [N_pad,1] f32, e0: [N,d] f32
    -> padded E_final [N_pad, d_pad] f32."""
    n_pad = adj_i8.shape[0]
    n, d = e0.shape
    d_pad = _round_up(d, LANE)

    # Keep >=2 row blocks when possible so v7x's 2 TCs both get work.
    tm = _pick_tile(n_pad, min(MAX_TM, max(LANE, n_pad // 2)))
    tk = _pick_tile(n_pad, MAX_TK)

    e = _pad2(e0.astype(jnp.float32), n_pad, d_pad)
    acc = e
    e_in = (e * dis_col).astype(jnp.bfloat16)     # D^{-1/2}-pre-scaled layer-0 input
    for _ in range(n_layers):
        layer, e_in = _ae_matmul(adj_i8, e_in, dis_col, tm=tm, tk=tk)
        acc = acc + layer                          # cheap O(N*d) layer-sum, f32
    return acc * (1.0 / (n_layers + 1))


# ------------- kernel 2: batched fused row-gather + dot-product score ---------

def _gather_score_kernel(uid_ref, iid_ref, e_hbm, out_ref, eu_buf, ei_buf, sem):
    base = pl.program_id(0) * SCORE_TB

    @pl.loop(0, SCORE_TB)
    def _issue(t):
        u = uid_ref[base + t]
        i = iid_ref[base + t]
        pltpu.make_async_copy(e_hbm.at[u], eu_buf.at[t], sem.at[0]).start()
        pltpu.make_async_copy(e_hbm.at[i], ei_buf.at[t], sem.at[1]).start()

    @pl.loop(0, SCORE_TB)
    def _drain(t):
        # All row copies of a side share one DMA semaphore; every completed copy
        # has identical shape, so each wait consumes exactly one completion.
        pltpu.make_async_copy(e_hbm.at[0], eu_buf.at[0], sem.at[0]).wait()
        pltpu.make_async_copy(e_hbm.at[0], ei_buf.at[0], sem.at[1]).wait()

    prod = eu_buf[...] * ei_buf[...]                       # (TB, 1, d_pad)  VPU
    out_ref[...] = jnp.sum(prod, axis=-1).astype(out_ref.dtype)   # (TB, 1) scores


def lightgcn_gather_score(e_final_pad, user_rows, item_rows):
    """e_final_pad: [N_pad, d_pad] f32 (stays in HBM); user/item_rows: [B] int32
    node ids -> [B] f32 scores, SCORE_TB pairs per grid step."""
    n_pad, d_pad = e_final_pad.shape
    b = user_rows.shape[0]
    b_pad = _round_up(b, SCORE_TB)
    uid = jnp.pad(user_rows.astype(jnp.int32), (0, b_pad - b))   # pad with row 0 (safe)
    iid = jnp.pad(item_rows.astype(jnp.int32), (0, b_pad - b))
    e3 = e_final_pad.reshape(n_pad, 1, d_pad)

    out = pl.pallas_call(
        _gather_score_kernel,
        out_shape=jax.ShapeDtypeStruct((b_pad, 1), jnp.float32),
        grid_spec=pltpu.PrefetchScalarGridSpec(
            num_scalar_prefetch=2,                 # user ids, item ids -> SMEM
            grid=(b_pad // SCORE_TB,),
            in_specs=[pl.BlockSpec(memory_space=pl.ANY)],        # E_final stays in HBM
            out_specs=pl.BlockSpec((SCORE_TB, 1), lambda s, uid, iid: (s, 0)),
            scratch_shapes=[
                pltpu.VMEM((SCORE_TB, 1, d_pad), jnp.float32),
                pltpu.VMEM((SCORE_TB, 1, d_pad), jnp.float32),
                pltpu.SemaphoreType.DMA((2,)),
            ],
        ),
        compiler_params=pltpu.CompilerParams(
            dimension_semantics=("parallel",)),     # batch axis independent (v7x 2 TCs)
    )(uid, iid, e3)
    return out[:b, 0]


# --------------------------------- forward ------------------------------------

def lightgcn_forward(adj_i8, dis_col, e0, n_users, user_ids, item_ids):
    """Full lightGCN.forward: propagate -> fused gather+score."""
    e_final_pad = lightgcn_propagate(adj_i8, dis_col, e0)
    user_rows = user_ids.astype(jnp.int32)
    item_rows = (item_ids + n_users).astype(jnp.int32)
    return lightgcn_gather_score(e_final_pad, user_rows, item_rows)


# ----------------------------------- main --------------------------------------

if __name__ == "__main__":
    key = jax.random.PRNGKey(0)
    k_r, k_e, k_u, k_i = jax.random.split(key, 4)

    n_users, n_items, emb_dim, batch = 32, 48, 16, 8
    n_nodes = n_users + n_items

    # Deterministic synthetic interaction matrix (stands in for inter_df).
    interactions = jax.random.bernoulli(
        k_r, p=0.2, shape=(n_users, n_items)).astype(jnp.float32)

    # Static prep (binary int8 adjacency + d^{-1/2}) done ONCE, outside the forward.
    adj_i8, dis_col = lightgcn_prepare(interactions)

    # Deterministic initial embeddings (stands in for pretrain_embs).
    e0 = 0.1 * jax.random.normal(k_e, (n_nodes, emb_dim), dtype=jnp.float32)

    # Batch of (user, item) ids = the module's input `x`.
    user_ids = jax.random.randint(k_u, (batch,), 0, n_users)
    item_ids = jax.random.randint(k_i, (batch,), 0, n_items)

    fwd = jax.jit(lightgcn_forward, static_argnums=(3,))
    score = fwd(adj_i8, dis_col, e0, n_users, user_ids, item_ids)
    score = jax.block_until_ready(score)

    # Pure-JAX f32 reference (adjacency exact in the kernel; only E is carried
    # in bf16 across layers, hence the tolerance).
    a = jnp.zeros((n_nodes, n_nodes), jnp.float32)
    a = a.at[:n_users, n_users:].set(interactions)
    a = a.at[n_users:, :n_users].set(interactions.T)
    deg = jnp.sum(a, axis=1)
    dis = jnp.where(deg > 0, 1.0 / jnp.sqrt(jnp.maximum(deg, 1e-12)), 0.0)
    adj_norm = a * dis[:, None] * dis[None, :]
    e_ref, acc_ref = e0, e0
    for _ in range(N_LAYERS):
        e_ref = adj_norm @ e_ref
        acc_ref = acc_ref + e_ref
    e_ref = acc_ref / (N_LAYERS + 1)
    ref = jnp.sum(e_ref[user_ids] * e_ref[n_users + item_ids], axis=1)
    np.testing.assert_allclose(np.asarray(score), np.asarray(ref),
                               rtol=3e-2, atol=1e-3)

    print("KERNEL_OK")
</pallas_src>

<mosaic_0001>
module attributes {stable_mosaic.version = 11 : i64} {
  func.func @_ae_matmul_kernel(%arg0: i32, %arg1: i32, %arg2: memref<128x128xi8, #tpu.memory_space<vmem>>, %arg3: memref<128x128xbf16, #tpu.memory_space<vmem>>, %arg4: memref<128x1xf32, #tpu.memory_space<vmem>>, %arg5: memref<128x128xf32, #tpu.memory_space<vmem>>, %arg6: memref<128x128xbf16, #tpu.memory_space<vmem>>) attributes {dimension_semantics = [#tpu.dimension_semantics<parallel>, #tpu.dimension_semantics<arbitrary>], iteration_bounds = array<i64: 1, 1>, scalar_prefetch = 0 : i64, scratch_operands = 0 : i64, tpu.core_type = #tpu.core_type<tc>, window_params = [{transform_indices = @transform_0, window_bounds = array<i64: 128, 128>}, {transform_indices = @transform_1, window_bounds = array<i64: 128, 128>}, {transform_indices = @transform_2, window_bounds = array<i64: 128, 1>}, {transform_indices = @transform_3, window_bounds = array<i64: 128, 128>}, {transform_indices = @transform_4, window_bounds = array<i64: 128, 128>}]} {
    %c0_i32 = arith.constant 0 : i32
    %0 = arith.cmpi eq, %arg1, %c0_i32 : i32
    %1 = arith.extui %0 : i1 to i32
    %c0_i32_0 = arith.constant 0 : i32
    %2 = arith.cmpi ne, %1, %c0_i32_0 : i32
    scf.if %2 {
      %cst_10 = arith.constant 0.000000e+00 : f32
      %14 = vector.broadcast %cst_10 : f32 to vector<128x128xf32>
      %c0_11 = arith.constant 0 : index
      %c0_12 = arith.constant 0 : index
      %15 = vector.load %arg5[%c0_11, %c0_12] : memref<128x128xf32, #tpu.memory_space<vmem>>, vector<128x128xf32>
      tpu.vector_store %arg5[%c0_11, %c0_12], %14 {strides = array<i32>} : memref<128x128xf32, #tpu.memory_space<vmem>>, vector<128x128xf32>,
    } else {
    }
    %c0 = arith.constant 0 : index
    %c0_1 = arith.constant 0 : index
    %3 = vector.load %arg2[%c0, %c0_1] : memref<128x128xi8, #tpu.memory_space<vmem>>, vector<128x128xi8>
    %4 = arith.sitofp %3 : vector<128x128xi8> to vector<128x128xf32>
    %5 = arith.truncf %4 : vector<128x128xf32> to vector<128x128xbf16>
    %c0_2 = arith.constant 0 : index
    %c0_3 = arith.constant 0 : index
    %6 = vector.load %arg5[%c0_2, %c0_3] : memref<128x128xf32, #tpu.memory_space<vmem>>, vector<128x128xf32>
    %c0_4 = arith.constant 0 : index
    %c0_5 = arith.constant 0 : index
    %7 = vector.load %arg3[%c0_4, %c0_5] : memref<128x128xbf16, #tpu.memory_space<vmem>>, vector<128x128xbf16>
    %cst = arith.constant dense<0.000000e+00> : vector<128x128xf32>
    %8 = tpu.matmul %5, %7, %cst {dimension_numbers = #tpu.dot_dimension_numbers<[1], [0], [0], [1], [0, 0, 1, 1], [], []>} : vector<128x128xbf16>, vector<128x128xbf16>, vector<128x128xf32> -> vector<128x128xf32>
    %9 = arith.addf %6, %8 : vector<128x128xf32>
    %c0_6 = arith.constant 0 : index
    %c0_7 = arith.constant 0 : index
    %10 = vector.load %arg5[%c0_6, %c0_7] : memref<128x128xf32, #tpu.memory_space<vmem>>, vector<128x128xf32>
    tpu.vector_store %arg5[%c0_6, %c0_7], %9 {strides = array<i32>} : memref<128x128xf32, #tpu.memory_space<vmem>>, vector<128x128xf32>,
    %c0_i32_8 = arith.constant 0 : i32
    %11 = arith.cmpi eq, %arg1, %c0_i32_8 : i32
    %12 = arith.extui %11 : i1 to i32
    %c0_i32_9 = arith.constant 0 : i32
    %13 = arith.cmpi ne, %12, %c0_i32_9 : i32
    scf.if %13 {
      %c0_10 = arith.constant 0 : index
      %c0_11 = arith.constant 0 : index
      %14 = vector.load %arg4[%c0_10, %c0_11] : memref<128x1xf32, #tpu.memory_space<vmem>>, vector<128x1xf32>
      %c0_12 = arith.constant 0 : index
      %c0_13 = arith.constant 0 : index
      %15 = vector.load %arg5[%c0_12, %c0_13] : memref<128x128xf32, #tpu.memory_space<vmem>>, vector<128x128xf32>
      %16 = vector.broadcast %14 : vector<128x1xf32> to vector<128x128xf32>
      %17 = arith.mulf %15, %16 : vector<128x128xf32>
      %c0_14 = arith.constant 0 : index
      %c0_15 = arith.constant 0 : index
      %18 = vector.load %arg5[%c0_14, %c0_15] : memref<128x128xf32, #tpu.memory_space<vmem>>, vector<128x128xf32>
      tpu.vector_store %arg5[%c0_14, %c0_15], %17 {strides = array<i32>} : memref<128x128xf32, #tpu.memory_space<vmem>>, vector<128x128xf32>,
      %19 = vector.broadcast %14 : vector<128x1xf32> to vector<128x128xf32>
      %20 = arith.mulf %17, %19 : vector<128x128xf32>
      %21 = arith.truncf %20 : vector<128x128xf32> to vector<128x128xbf16>
      %c0_16 = arith.constant 0 : index
      %c0_17 = arith.constant 0 : index
      %22 = vector.load %arg6[%c0_16, %c0_17] : memref<128x128xbf16, #tpu.memory_space<vmem>>, vector<128x128xbf16>
      tpu.vector_store %arg6[%c0_16, %c0_17], %21 {strides = array<i32>} : memref<128x128xbf16, #tpu.memory_space<vmem>>, vector<128x128xbf16>,
    } else {
    }
    return
  }
  func.func @transform_0(%arg0: i32, %arg1: i32) -> (i32, i32) {
    %c0_i32 = arith.constant 0 : i32
    return %arg0, %arg1 : i32, i32
  }
  func.func @transform_1(%arg0: i32, %arg1: i32) -> (i32, i32) {
    %c0_i32 = arith.constant 0 : i32
    %c0_i32_0 = arith.constant 0 : i32
    return %arg1, %c0_i32 : i32, i32
  }
  func.func @transform_2(%arg0: i32, %arg1: i32) -> (i32, i32) {
    %c0_i32 = arith.constant 0 : i32
    %c0_i32_0 = arith.constant 0 : i32
    return %arg0, %c0_i32 : i32, i32
  }
  func.func @transform_3(%arg0: i32, %arg1: i32) -> (i32, i32) {
    %c0_i32 = arith.constant 0 : i32
    %c0_i32_0 = arith.constant 0 : i32
    return %arg0, %c0_i32 : i32, i32
  }
  func.func @transform_4(%arg0: i32, %arg1: i32) -> (i32, i32) {
    %c0_i32 = arith.constant 0 : i32
    %c0_i32_0 = arith.constant 0 : i32
    return %arg0, %c0_i32 : i32, i32
  }
}

module attributes {stable_mosaic.version = 11 : i64} {
  func.func @_ae_matmul_kernel(%arg0: i32, %arg1: i32, %arg2: memref<128x128xi8, #tpu.memory_space<vmem>>, %arg3: memref<128x128xbf16, #tpu.memory_space<vmem>>, %arg4: memref<128x1xf32, #tpu.memory_space<vmem>>, %arg5: memref<128x128xf32, #tpu.memory_space<vmem>>, %arg6: memref<128x128xbf16, #tpu.memory_space<vmem>>) attributes {dimension_semantics = [#tpu.dimension_semantics<parallel>, #tpu.dimension_semantics<arbitrary>], iteration_bounds = array<i64: 1, 1>, scalar_prefetch = 0 : i64, scratch_operands = 0 : i64, tpu.core_type = #tpu.core_type<tc>, window_params = [{transform_indices = @transform_0, window_bounds = array<i64: 128, 128>}, {transform_indices = @transform_1, window_bounds = array<i64: 128, 128>}, {transform_indices = @transform_2, window_bounds = array<i64: 128, 1>}, {transform_indices = @transform_3, window_bounds = array<i64: 128, 128>}, {transform_indices = @transform_4, window_bounds = array<i64: 128, 128>}]} {
    %c0_i32 = arith.constant 0 : i32
    %0 = arith.cmpi eq, %arg1, %c0_i32 : i32
    %1 = arith.extui %0 : i1 to i32
    %c0_i32_0 = arith.constant 0 : i32
    %2 = arith.cmpi ne, %1, %c0_i32_0 : i32
    scf.if %2 {
      %cst_10 = arith.constant 0.000000e+00 : f32
      %14 = vector.broadcast %cst_10 : f32 to vector<128x128xf32>
      %c0_11 = arith.constant 0 : index
      %c0_12 = arith.constant 0 : index
      %15 = vector.load %arg5[%c0_11, %c0_12] : memref<128x128xf32, #tpu.memory_space<vmem>>, vector<128x128xf32>
      tpu.vector_store %arg5[%c0_11, %c0_12], %14 {strides = array<i32>} : memref<128x128xf32, #tpu.memory_space<vmem>>, vector<128x128xf32>,
    } else {
    }
    %c0 = arith.constant 0 : index
    %c0_1 = arith.constant 0 : index
    %3 = vector.load %arg2[%c0, %c0_1] : memref<128x128xi8, #tpu.memory_space<vmem>>, vector<128x128xi8>
    %4 = arith.sitofp %3 : vector<128x128xi8> to vector<128x128xf32>
    %5 = arith.truncf %4 : vector<128x128xf32> to vector<128x128xbf16>
    %c0_2 = arith.constant 0 : index
    %c0_3 = arith.constant 0 : index
    %6 = vector.load %arg5[%c0_2, %c0_3] : memref<128x128xf32, #tpu.memory_space<vmem>>, vector<128x128xf32>
    %c0_4 = arith.constant 0 : index
    %c0_5 = arith.constant 0 : index
    %7 = vector.load %arg3[%c0_4, %c0_5] : memref<128x128xbf16, #tpu.memory_space<vmem>>, vector<128x128xbf16>
    %cst = arith.constant dense<0.000000e+00> : vector<128x128xf32>
    %8 = tpu.matmul %5, %7, %cst {dimension_numbers = #tpu.dot_dimension_numbers<[1], [0], [0], [1], [0, 0, 1, 1], [], []>} : vector<128x128xbf16>, vector<128x128xbf16>, vector<128x128xf32> -> vector<128x128xf32>
    %9 = arith.addf %6, %8 : vector<128x128xf32>
    %c0_6 = arith.constant 0 : index
    %c0_7 = arith.constant 0 : index
    %10 = vector.load %arg5[%c0_6, %c0_7] : memref<128x128xf32, #tpu.memory_space<vmem>>, vector<128x128xf32>
    tpu.vector_store %arg5[%c0_6, %c0_7], %9 {strides = array<i32>} : memref<128x128xf32, #tpu.memory_space<vmem>>, vector<128x128xf32>,
    %c0_i32_8 = arith.constant 0 : i32
    %11 = arith.cmpi eq, %arg1, %c0_i32_8 : i32
    %12 = arith.extui %11 : i1 to i32
    %c0_i32_9 = arith.constant 0 : i32
    %13 = arith.cmpi ne, %12, %c0_i32_9 : i32
    scf.if %13 {
      %c0_10 = arith.constant 0 : index
      %c0_11 = arith.constant 0 : index
      %14 = vector.load %arg4[%c0_10, %c0_11] : memref<128x1xf32, #tpu.memory_space<vmem>>, vector<128x1xf32>
      %c0_12 = arith.constant 0 : index
      %c0_13 = arith.constant 0 : index
      %15 = vector.load %arg5[%c0_12, %c0_13] : memref<128x128xf32, #tpu.memory_space<vmem>>, vector<128x128xf32>
      %16 = vector.broadcast %14 : vector<128x1xf32> to vector<128x128xf32>
      %17 = arith.mulf %15, %16 : vector<128x128xf32>
      %c0_14 = arith.constant 0 : index
      %c0_15 = arith.constant 0 : index
      %18 = vector.load %arg5[%c0_14, %c0_15] : memref<128x128xf32, #tpu.memory_space<vmem>>, vector<128x128xf32>
      tpu.vector_store %arg5[%c0_14, %c0_15], %17 {strides = array<i32>} : memref<128x128xf32, #tpu.memory_space<vmem>>, vector<128x128xf32>,
      %19 = vector.broadcast %14 : vector<128x1xf32> to vector<128x128xf32>
      %20 = arith.mulf %17, %19 : vector<128x128xf32>
      %21 = arith.truncf %20 : vector<128x128xf32> to vector<128x128xbf16>
      %c0_16 = arith.constant 0 : index
      %c0_17 = arith.constant 0 : index
      %22 = vector.load %arg6[%c0_16, %c0_17] : memref<128x128xbf16, #tpu.memory_space<vmem>>, vector<128x128xbf16>
      tpu.vector_store %arg6[%c0_16, %c0_17], %21 {strides = array<i32>} : memref<128x128xbf16, #tpu.memory_space<vmem>>, vector<128x128xbf16>,
    } else {
    }
    return
  }
  func.func @transform_0(%arg0: i32, %arg1: i32) -> (i32, i32) {
    %c0_i32 = arith.constant 0 : i32
    return %arg0, %arg1 : i32, i32
  }
  func.func @transform_1(%arg0: i32, %arg1: i32) -> (i32, i32) {
    %c0_i32 = arith.constant 0 : i32
    %c0_i32_0 = arith.constant 0 : i32
    return %arg1, %c0_i32 : i32, i32
  }
  func.func @transform_2(%arg0: i32, %arg1: i32) -> (i32, i32) {
    %c0_i32 = arith.constant 0 : i32
    %c0_i32_0 = arith.constant 0 : i32
    return %arg0, %c0_i32 : i32, i32
  }
  func.func @transform_3(%arg0: i32, %arg1: i32) -> (i32, i32) {
    %c0_i32 = arith.constant 0 : i32
    %c0_i32_0 = arith.constant 0 : i32
    return %arg0, %c0_i32 : i32, i32
  }
  func.func @transform_4(%arg0: i32, %arg1: i32) -> (i32, i32) {
    %c0_i32 = arith.constant 0 : i32
    %c0_i32_0 = arith.constant 0 : i32
    return %arg0, %c0_i32 : i32, i32
  }
}

module attributes {stable_mosaic.version = 11 : i64} {
  func.func @_gather_score_kernel(%arg0: i32, %arg1: memref<128xi32, #tpu.memory_space<smem>>, %arg2: memref<128xi32, #tpu.memory_space<smem>>, %arg3: memref<128x1x128xf32, #tpu.memory_space<any>>, %arg4: memref<128x1xf32, #tpu.memory_space<vmem>>, %arg5: memref<128x1x128xf32, #tpu.memory_space<vmem>>, %arg6: memref<128x1x128xf32, #tpu.memory_space<vmem>>, %arg7: memref<2x!tpu.dma_semaphore, #tpu.memory_space<semaphore_mem>>) attributes {dimension_semantics = [#tpu.dimension_semantics<parallel>], iteration_bounds = array<i64: 1>, scalar_prefetch = 2 : i64, scratch_operands = 3 : i64, tpu.core_type = #tpu.core_type<tc>, window_params = [{}, {transform_indices = @transform_1, window_bounds = array<i64: 128, 1>}]} {
    %c128_i32 = arith.constant 128 : i32
    %0 = arith.muli %arg0, %c128_i32 : i32
    %c0_i32 = arith.constant 0 : i32
    %c128_i32_0 = arith.constant 128 : i32
    %1 = arith.addi %c0_i32, %c128_i32_0 : i32
    %c1_i32 = arith.constant 1 : i32
    scf.for %arg8 = %c0_i32 to %1 step %c1_i32  : i32 {
      %c1_i32_12 = arith.constant 1 : i32
      %8 = arith.muli %arg8, %c1_i32_12 : i32
      %c0_i32_13 = arith.constant 0 : i32
      %9 = arith.addi %c0_i32_13, %8 : i32
      %10 = arith.addi %0, %9 : i32
      %11 = arith.index_cast %10 : i32 to index
      %12 = memref.load %arg1[%11] : memref<128xi32, #tpu.memory_space<smem>>
      %13 = arith.addi %0, %9 : i32
      %14 = arith.index_cast %13 : i32 to index
      %15 = memref.load %arg2[%14] : memref<128xi32, #tpu.memory_space<smem>>
      %c0_i32_14 = arith.constant 0 : i32
      %c0_i32_15 = arith.constant 0 : i32
      %c0_i32_16 = arith.constant 0 : i32
      %16 = tpu.memref_slice %arg3[%12, %c0_i32_15, %c0_i32_16] : memref<128x1x128xf32, #tpu.memory_space<any>> -> memref<1x1x128xf32, #tpu.memory_space<any>>
      %17 = tpu.memref_squeeze %16 : memref<1x1x128xf32, #tpu.memory_space<any>> -> memref<1x128xf32, #tpu.memory_space<any>>
      %c0_i32_17 = arith.constant 0 : i32
      %c0_i32_18 = arith.constant 0 : i32
      %18 = tpu.memref_slice %arg5[%9, %c0_i32_17, %c0_i32_18] : memref<128x1x128xf32, #tpu.memory_space<vmem>> -> memref<1x1x128xf32, #tpu.memory_space<vmem>>
      %19 = tpu.memref_squeeze %18 : memref<1x1x128xf32, #tpu.memory_space<vmem>> -> memref<1x128xf32, #tpu.memory_space<vmem>>
      %20 = tpu.memref_slice %arg7[%c0_i32_14] : memref<2x!tpu.dma_semaphore, #tpu.memory_space<semaphore_mem>> -> memref<1x!tpu.dma_semaphore, #tpu.memory_space<semaphore_mem>>
      %21 = tpu.memref_squeeze %20 : memref<1x!tpu.dma_semaphore, #tpu.memory_space<semaphore_mem>> -> memref<!tpu.dma_semaphore, #tpu.memory_space<semaphore_mem>>
      tpu.enqueue_dma source(%17 : memref<1x128xf32, #tpu.memory_space<any>>) target(%19 : memref<1x128xf32, #tpu.memory_space<vmem>>) target_semaphore(%21 : memref<!tpu.dma_semaphore, #tpu.memory_space<semaphore_mem>>)
      %c1_i32_19 = arith.constant 1 : i32
      %c0_i32_20 = arith.constant 0 : i32
      %c0_i32_21 = arith.constant 0 : i32
      %22 = tpu.memref_slice %arg3[%15, %c0_i32_20, %c0_i32_21] : memref<128x1x128xf32, #tpu.memory_space<any>> -> memref<1x1x128xf32, #tpu.memory_space<any>>
      %23 = tpu.memref_squeeze %22 : memref<1x1x128xf32, #tpu.memory_space<any>> -> memref<1x128xf32, #tpu.memory_space<any>>
      %c0_i32_22 = arith.constant 0 : i32
      %c0_i32_23 = arith.constant 0 : i32
      %24 = tpu.memref_slice %arg6[%9, %c0_i32_22, %c0_i32_23] : memref<128x1x128xf32, #tpu.memory_space<vmem>> -> memref<1x1x128xf32, #tpu.memory_space<vmem>>
      %25 = tpu.memref_squeeze %24 : memref<1x1x128xf32, #tpu.memory_space<vmem>> -> memref<1x128xf32, #tpu.memory_space<vmem>>
      %26 = tpu.memref_slice %arg7[%c1_i32_19] : memref<2x!tpu.dma_semaphore, #tpu.memory_space<semaphore_mem>> -> memref<1x!tpu.dma_semaphore, #tpu.memory_space<semaphore_mem>>
      %27 = tpu.memref_squeeze %26 : memref<1x!tpu.dma_semaphore, #tpu.memory_space<semaphore_mem>> -> memref<!tpu.dma_semaphore, #tpu.memory_space<semaphore_mem>>
      tpu.enqueue_dma source(%23 : memref<1x128xf32, #tpu.memory_space<any>>) target(%25 : memref<1x128xf32, #tpu.memory_space<vmem>>) target_semaphore(%27 : memref<!tpu.dma_semaphore, #tpu.memory_space<semaphore_mem>>)
    }
    %c128_i32_1 = arith.constant 128 : i32
    %c0_i32_2 = arith.constant 0 : i32
    %c128_i32_3 = arith.constant 128 : i32
    %2 = arith.addi %c0_i32_2, %c128_i32_3 : i32
    %c1_i32_4 = arith.constant 1 : i32
    scf.for %arg8 = %c0_i32_2 to %2 step %c1_i32_4  : i32 {
      %c0_i32_12 = arith.constant 0 : i32
      %c0_i32_13 = arith.constant 0 : i32
      %c0_i32_14 = arith.constant 0 : i32
      %c0_i32_15 = arith.constant 0 : i32
      %c0_i32_16 = arith.constant 0 : i32
      %8 = tpu.memref_slice %arg3[%c0_i32_12, %c0_i32_15, %c0_i32_16] : memref<128x1x128xf32, #tpu.memory_space<any>> -> memref<1x1x128xf32, #tpu.memory_space<any>>
      %9 = tpu.memref_squeeze %8 : memref<1x1x128xf32, #tpu.memory_space<any>> -> memref<1x128xf32, #tpu.memory_space<any>>
      %c0_i32_17 = arith.constant 0 : i32
      %c0_i32_18 = arith.constant 0 : i32
      %10 = tpu.memref_slice %arg5[%c0_i32_13, %c0_i32_17, %c0_i32_18] : memref<128x1x128xf32, #tpu.memory_space<vmem>> -> memref<1x1x128xf32, #tpu.memory_space<vmem>>
      %11 = tpu.memref_squeeze %10 : memref<1x1x128xf32, #tpu.memory_space<vmem>> -> memref<1x128xf32, #tpu.memory_space<vmem>>
      %12 = tpu.memref_slice %arg7[%c0_i32_14] : memref<2x!tpu.dma_semaphore, #tpu.memory_space<semaphore_mem>> -> memref<1x!tpu.dma_semaphore, #tpu.memory_space<semaphore_mem>>
      %13 = tpu.memref_squeeze %12 : memref<1x!tpu.dma_semaphore, #tpu.memory_space<semaphore_mem>> -> memref<!tpu.dma_semaphore, #tpu.memory_space<semaphore_mem>>
      tpu.wait_dma2 semaphore(%13 : memref<!tpu.dma_semaphore, #tpu.memory_space<semaphore_mem>>) src(%9 : memref<1x128xf32, #tpu.memory_space<any>>) dst(%11 : memref<1x128xf32, #tpu.memory_space<vmem>>)
      %c0_i32_19 = arith.constant 0 : i32
      %c0_i32_20 = arith.constant 0 : i32
      %c1_i32_21 = arith.constant 1 : i32
      %c0_i32_22 = arith.constant 0 : i32
      %c0_i32_23 = arith.constant 0 : i32
      %14 = tpu.memref_slice %arg3[%c0_i32_19, %c0_i32_22, %c0_i32_23] : memref<128x1x128xf32, #tpu.memory_space<any>> -> memref<1x1x128xf32, #tpu.memory_space<any>>
      %15 = tpu.memref_squeeze %14 : memref<1x1x128xf32, #tpu.memory_space<any>> -> memref<1x128xf32, #tpu.memory_space<any>>
      %c0_i32_24 = arith.constant 0 : i32
      %c0_i32_25 = arith.constant 0 : i32
      %16 = tpu.memref_slice %arg6[%c0_i32_20, %c0_i32_24, %c0_i32_25] : memref<128x1x128xf32, #tpu.memory_space<vmem>> -> memref<1x1x128xf32, #tpu.memory_space<vmem>>
      %17 = tpu.memref_squeeze %16 : memref<1x1x128xf32, #tpu.memory_space<vmem>> -> memref<1x128xf32, #tpu.memory_space<vmem>>
      %18 = tpu.memref_slice %arg7[%c1_i32_21] : memref<2x!tpu.dma_semaphore, #tpu.memory_space<semaphore_mem>> -> memref<1x!tpu.dma_semaphore, #tpu.memory_space<semaphore_mem>>
      %19 = tpu.memref_squeeze %18 : memref<1x!tpu.dma_semaphore, #tpu.memory_space<semaphore_mem>> -> memref<!tpu.dma_semaphore, #tpu.memory_space<semaphore_mem>>
      tpu.wait_dma2 semaphore(%19 : memref<!tpu.dma_semaphore, #tpu.memory_space<semaphore_mem>>) src(%15 : memref<1x128xf32, #tpu.memory_space<any>>) dst(%17 : memref<1x128xf32, #tpu.memory_space<vmem>>)
    }
    %c0 = arith.constant 0 : index
    %c0_5 = arith.constant 0 : index
    %c0_6 = arith.constant 0 : index
    %3 = vector.load %arg5[%c0, %c0_5, %c0_6] : memref<128x1x128xf32, #tpu.memory_space<vmem>>, vector<128x1x128xf32>
    %c0_7 = arith.constant 0 : index
    %c0_8 = arith.constant 0 : index
    %c0_9 = arith.constant 0 : index
    %4 = vector.load %arg6[%c0_7, %c0_8, %c0_9] : memref<128x1x128xf32, #tpu.memory_space<vmem>>, vector<128x1x128xf32>
    %5 = arith.mulf %3, %4 : vector<128x1x128xf32>
    %cst = arith.constant dense<0.000000e+00> : vector<128x1xf32>
    %6 = vector.multi_reduction <add>, %5, %cst [2] : vector<128x1x128xf32> to vector<128x1xf32>
    %c0_10 = arith.constant 0 : index
    %c0_11 = arith.constant 0 : index
    %7 = vector.load %arg4[%c0_10, %c0_11] : memref<128x1xf32, #tpu.memory_space<vmem>>, vector<128x1xf32>
    tpu.vector_store %arg4[%c0_10, %c0_11], %6 {strides = array<i32>} : memref<128x1xf32, #tpu.memory_space<vmem>>, vector<128x1xf32>,
    return
  }
  func.func @transform_1(%arg0: i32, %arg1: memref<128xi32, #tpu.memory_space<smem>>, %arg2: memref<128xi32, #tpu.memory_space<smem>>) -> (i32, i32) {
    %c0_i32 = arith.constant 0 : i32
    %c0_i32_0 = arith.constant 0 : i32
    return %arg0, %c0_i32 : i32, i32
  }
}

</mosaic_0001>

<llo_original>
// kernel: lightgcn_forward.4
$region0: #{lightgcn_forward.4}
  #allocation0 [shape = 'u32[]', space=smem, size = 0x4, offset = 0x4, fixed_abs, tag = 'smem constant byte address 0x4 - core index']
  #allocation1 [shape = 'u32[144,128]{1,0:T(1,128)}', space=vmem, size = 0x12000, scoped, tag = 'internal scratch']
  %s0 = inlined_call_operand.vmem [shape: s8[128,128], index: 0, kind: input, shape index: {}]
  %s1 = inlined_call_operand.vmem [shape: bf16[128,128], index: 1, kind: input, shape index: {}]
  %s2 = inlined_call_operand.vmem [shape: f32[128,1], index: 2, kind: input, shape index: {}]
  %s3 = inlined_call_operand.vmem [shape: f32[128,128], index: 3, kind: output, shape index: {0}]
  %s4 = inlined_call_operand.vmem [shape: bf16[128,128], index: 4, kind: output, shape index: {1}]
  %5 = xla_tuple %s3, %s4
  %s6 = sld [smem:[#allocation0]]
  $region38: #{lightgcn_forward.4} parent=0
    _
  %s8 = ssub.s32 1, %s6
  %s9 = scalar_select 0, %s8, %s6
  // Predicated region
  $region2: #{lightgcn_forward.4} parent=0 // pred_check
    _
  $region3: #{lightgcn_forward.4} parent=0 // pred_check_branch
    %11 = sbr.rel (0) target = $region5
  $region4: #{lightgcn_forward.4} parent=0 // pred_region
    _
  $region5: #{lightgcn_forward.4} parent=0 // pred_fallthru
    _
  // Predicated region
  $region6: #{lightgcn_forward.4} parent=0 // pred_check
    _
  $region7: #{lightgcn_forward.4} parent=0 // pred_check_branch
    %13 = sbr.rel (0) target = $region9
  $region8: #{lightgcn_forward.4} parent=0 // pred_region
    _
  $region9: #{lightgcn_forward.4} parent=0 // pred_fallthru
    _
  // Predicated region
  $region10: #{lightgcn_forward.4} parent=0 // pred_check
    _
  $region11: #{lightgcn_forward.4} parent=0 // pred_check_branch
    %15 = sbr.rel (0) target = $region13
  $region12: #{lightgcn_forward.4} parent=0 // pred_region
    _
  $region13: #{lightgcn_forward.4} parent=0 // pred_fallthru
    _
  %p17 = scmp.eq.s32.totalorder 0, 0
  // Predicated region
  $region14: #{lightgcn_forward.4} parent=0 // pred_check
    %p18 = pneg %p17
  $region15: #{lightgcn_forward.4} parent=0 // pred_check_branch
    %20 = sbr.rel (%p18) target = $region17
  $region16: #{lightgcn_forward.4} parent=0 // pred_region
    %21 = vst [vmem:[%s3] sm:$0xff] 0.0
    %22 = vst [vmem:[%s3 + $0x8] sm:$0xff] 0.0
    %23 = vst [vmem:[%s3 + $0x10] sm:$0xff] 0.0
    %24 = vst [vmem:[%s3 + $0x18] sm:$0xff] 0.0
    %25 = vst [vmem:[%s3 + $0x20] sm:$0xff] 0.0
    %26 = vst [vmem:[%s3 + $0x28] sm:$0xff] 0.0
    %27 = vst [vmem:[%s3 + $0x30] sm:$0xff] 0.0
    %28 = vst [vmem:[%s3 + $0x38] sm:$0xff] 0.0
    %29 = vst [vmem:[%s3 + $0x40] sm:$0xff] 0.0
    %30 = vst [vmem:[%s3 + $0x48] sm:$0xff] 0.0
    %31 = vst [vmem:[%s3 + $0x50] sm:$0xff] 0.0
    %32 = vst [vmem:[%s3 + $0x58] sm:$0xff] 0.0
    %33 = vst [vmem:[%s3 + $0x60] sm:$0xff] 0.0
    %34 = vst [vmem:[%s3 + $0x68] sm:$0xff] 0.0
    %35 = vst [vmem:[%s3 + $0x70] sm:$0xff] 0.0
    %36 = vst [vmem:[%s3 + $0x78] sm:$0xff] 0.0
  $region17: #{lightgcn_forward.4} parent=0 // pred_fallthru
    _
  %v37 = vld [vmem:[%s0] sm:$0xff]
  %v38 = vld [vmem:[%s0 + $0x8] sm:$0xff]
  %v39 = vld [vmem:[%s0 + $0x10] sm:$0xff]
  %v40 = vld [vmem:[%s0 + $0x18] sm:$0xff]
  %v41 = vunpack.c.l.s8.bf16 %v37
  %v42 = vunpack.c.h.s8.bf16 %v37
  %v43 = vunpack.c.l.s8.bf16 %v38
  %v44 = vunpack.c.h.s8.bf16 %v38
  %v45 = vunpack.c.l.s8.bf16 %v39
  %v46 = vunpack.c.h.s8.bf16 %v39
  %v47 = vunpack.c.l.s8.bf16 %v40
  %v48 = vunpack.c.h.s8.bf16 %v40
  %v49 = vld [vmem:[%s3] sm:$0xff]
  %v50 = vld [vmem:[%s3 + $0x8] sm:$0xff]
  %v51 = vld [vmem:[%s3 + $0x10] sm:$0xff]
  %v52 = vld [vmem:[%s3 + $0x18] sm:$0xff]
  %v53 = vld [vmem:[%s3 + $0x20] sm:$0xff]
  %v54 = vld [vmem:[%s3 + $0x28] sm:$0xff]
  %v55 = vld [vmem:[%s3 + $0x30] sm:$0xff]
  %v56 = vld [vmem:[%s3 + $0x38] sm:$0xff]
  %v57 = vld [vmem:[%s3 + $0x40] sm:$0xff]
  %v58 = vld [vmem:[%s3 + $0x48] sm:$0xff]
  %v59 = vld [vmem:[%s3 + $0x50] sm:$0xff]
  %v60 = vld [vmem:[%s3 + $0x58] sm:$0xff]
  %v61 = vld [vmem:[%s3 + $0x60] sm:$0xff]
  %v62 = vld [vmem:[%s3 + $0x68] sm:$0xff]
  %v63 = vld [vmem:[%s3 + $0x70] sm:$0xff]
  %v64 = vld [vmem:[%s3 + $0x78] sm:$0xff]
  %v65 = vld [vmem:[%s1] sm:$0xf]
  %v66 = vld [vmem:[%s1 + $0x4] sm:$0xf]
  %v67 = vld [vmem:[%s1 + $0x8] sm:$0xf]
  %v68 = vld [vmem:[%s1 + $0xc] sm:$0xf]
  %v69 = vld [vmem:[%s1 + $0x10] sm:$0xf]
  %v70 = vld [vmem:[%s1 + $0x14] sm:$0xf]
  %v71 = vld [vmem:[%s1 + $0x18] sm:$0xf]
  %v72 = vld [vmem:[%s1 + $0x1c] sm:$0xf]
  %v73 = vld [vmem:[%s1 + $0x20] sm:$0xf]
  %v74 = vld [vmem:[%s1 + $0x24] sm:$0xf]
  %v75 = vld [vmem:[%s1 + $0x28] sm:$0xf]
  %v76 = vld [vmem:[%s1 + $0x2c] sm:$0xf]
  %v77 = vld [vmem:[%s1 + $0x30] sm:$0xf]
  %v78 = vld [vmem:[%s1 + $0x34] sm:$0xf]
  %v79 = vld [vmem:[%s1 + $0x38] sm:$0xf]
  %v80 = vld [vmem:[%s1 + $0x3c] sm:$0xf]
  %v97 = vunpack.c.l.b16 %v65
  %v98 = vunpack.c.l.b16 %v66
  %v99 = vunpack.c.l.b16 %v67
  %v100 = vunpack.c.l.b16 %v68
  %v101 = vunpack.c.l.b16 %v69
  %v102 = vunpack.c.l.b16 %v70
  %v103 = vunpack.c.l.b16 %v71
  %v104 = vunpack.c.l.b16 %v72
  %v105 = vunpack.c.l.b16 %v73
  %v106 = vunpack.c.l.b16 %v74
  %v107 = vunpack.c.l.b16 %v75
  %v108 = vunpack.c.l.b16 %v76
  %v109 = vunpack.c.l.b16 %v77
  %v110 = vunpack.c.l.b16 %v78
  %v111 = vunpack.c.l.b16 %v79
  %v112 = vunpack.c.l.b16 %v80
  %v113 = vpack.c.b16 %v98, %v97
  %v114 = vpack.c.b16 %v100, %v99
  %v115 = vpack.c.b16 %v102, %v101
  %v116 = vpack.c.b16 %v104, %v103
  %v117 = vpack.c.b16 %v106, %v105
  %v118 = vpack.c.b16 %v108, %v107
  %v119 = vpack.c.b16 %v110, %v109
  %v120 = vpack.c.b16 %v112, %v111
  %129 = vmatprep.subr.bf16.mxu0 0
  %130 = vmatpush1.bf16.msra.mxu0 %v113
  %131 = vmatprep.subr.bf16.mxu0 0
  %132 = vmatpush1.bf16.msra.mxu0 %v114
  %133 = vmatprep.subr.bf16.mxu0 0
  %134 = vmatpush1.bf16.msra.mxu0 %v115
  %135 = vmatprep.subr.bf16.mxu0 0
  %136 = vmatpush1.bf16.msra.mxu0 %v116
  %137 = vmatprep.subr.bf16.mxu0 0
  %138 = vmatpush1.bf16.msra.mxu0 %v117
  %139 = vmatprep.subr.bf16.mxu0 0
  %140 = vmatpush1.bf16.msra.mxu0 %v118
  %141 = vmatprep.subr.bf16.mxu0 0
  %142 = vmatpush1.bf16.msra.mxu0 %v119
  %143 = vmatprep.subr.bf16.mxu0 0
  %144 = vmatpush1.bf16.msra.mxu0 %v120
  %145 = vmatprep.subr.bf16.mxu0 0
  %146 = vmatpush1.bf16.msra.mxu0 0
  %147 = vmatprep.subr.bf16.mxu0 0
  %148 = vmatpush1.bf16.msra.mxu0 0
  %149 = vmatprep.subr.bf16.mxu0 0
  %150 = vmatpush1.bf16.msra.mxu0 0
  %151 = vmatprep.subr.bf16.mxu0 0
  %152 = vmatpush1.bf16.msra.mxu0 0
  %153 = vmatprep.subr.bf16.mxu0 0
  %154 = vmatpush1.bf16.msra.mxu0 0
  %155 = vmatprep.subr.bf16.mxu0 0
  %156 = vmatpush1.bf16.msra.mxu0 0
  %157 = vmatprep.subr.bf16.mxu0 0
  %158 = vmatpush1.bf16.msra.mxu0 0
  %159 = vmatprep.subr.bf16.mxu0 0
  %160 = vmatpush1.bf16.msra.mxu0 0
  %161 = vmatprep.mubr.bf16.mxu0 0
  %162 = vmatmul.mubr.bf16.gmra.mrb[0].mxu0 %v41
  %v163 = vpop.f32.mrb[0].mxu0
  %v164 = vadd.f32 0.0, %v163
  %v165 = vpop.f32.mrb[0].mxu0
  %v166 = vpop.f32.mrb[0].mxu0
  %v167 = vadd.f32 0.0, %v166
  %v168 = vpop.f32.mrb[0].mxu0
  %169 = vmatprep.mubr.bf16.mxu0 0
  %170 = vmatmul.mubr.bf16.gmra.mrb[0].mxu0 %v42
  %v171 = vpop.f32.mrb[0].mxu0
  %v172 = vadd.f32 0.0, %v171
  %v173 = vpop.f32.mrb[0].mxu0
  %v174 = vpop.f32.mrb[0].mxu0
  %v175 = vadd.f32 0.0, %v174
  %v176 = vpop.f32.mrb[0].mxu0
  %177 = vmatprep.mubr.bf16.mxu0 0
  %178 = vmatmul.mubr.bf16.gmra.mrb[0].mxu0 %v43
  %v179 = vpop.f32.mrb[0].mxu0
  %v180 = vadd.f32 0.0, %v179
  %v181 = vpop.f32.mrb[0].mxu0
  %v182 = vpop.f32.mrb[0].mxu0
  %v183 = vadd.f32 0.0, %v182
  %v184 = vpop.f32.mrb[0].mxu0
  %185 = vmatprep.mubr.bf16.mxu0 0
  %186 = vmatmul.mubr.bf16.gmra.mrb[0].mxu0 %v44
  %v187 = vpop.f32.mrb[0].mxu0
  %v188 = vadd.f32 0.0, %v187
  %v189 = vpop.f32.mrb[0].mxu0
  %v190 = vpop.f32.mrb[0].mxu0
  %v191 = vadd.f32 0.0, %v190
  %v192 = vpop.f32.mrb[0].mxu0
  %193 = vmatprep.mubr.bf16.mxu0 0
  %194 = vmatmul.mubr.bf16.gmra.mrb[0].mxu0 %v45
  %v195 = vpop.f32.mrb[0].mxu0
  %v196 = vadd.f32 0.0, %v195
  %v197 = vpop.f32.mrb[0].mxu0
  %v198 = vpop.f32.mrb[0].mxu0
  %v199 = vadd.f32 0.0, %v198
  %v200 = vpop.f32.mrb[0].mxu0
  %201 = vmatprep.mubr.bf16.mxu0 0
  %202 = vmatmul.mubr.bf16.gmra.mrb[0].mxu0 %v46
  %v203 = vpop.f32.mrb[0].mxu0
  %v204 = vadd.f32 0.0, %v203
  %v205 = vpop.f32.mrb[0].mxu0
  %v206 = vpop.f32.mrb[0].mxu0
  %v207 = vadd.f32 0.0, %v206
  %v208 = vpop.f32.mrb[0].mxu0
  %209 = vmatprep.mubr.bf16.mxu0 0
  %210 = vmatmul.mubr.bf16.gmra.mrb[0].mxu0 %v47
  %v211 = vpop.f32.mrb[0].mxu0
  %v212 = vadd.f32 0.0, %v211
  %v213 = vpop.f32.mrb[0].mxu0
  %v214 = vpop.f32.mrb[0].mxu0
  %v215 = vadd.f32 0.0, %v214
  %v216 = vpop.f32.mrb[0].mxu0
  %217 = vmatprep.mubr.bf16.mxu0 0
  %218 = vmatmul.mubr.bf16.gmra.mrb[0].mxu0 %v48
  %v219 = vpop.f32.mrb[0].mxu0
  %v220 = vadd.f32 0.0, %v219
  %v221 = vpop.f32.mrb[0].mxu0
  %v222 = vpop.f32.mrb[0].mxu0
  %v223 = vadd.f32 0.0, %v222
  %v224 = vpop.f32.mrb[0].mxu0
  %225 = vdwg.mxu0
  %v226 = vadd.f32 %v49, %v164
  %v227 = vadd.f32 %v50, %v167
  %v228 = vadd.f32 %v51, %v172
  %v229 = vadd.f32 %v52, %v175
  %v230 = vadd.f32 %v53, %v180
  %v231 = vadd.f32 %v54, %v183
  %v232 = vadd.f32 %v55, %v188
  %v233 = vadd.f32 %v56, %v191
  %v234 = vadd.f32 %v57, %v196
  %v235 = vadd.f32 %v58, %v199
  %v236 = vadd.f32 %v59, %v204
  %v237 = vadd.f32 %v60, %v207
  %v238 = vadd.f32 %v61, %v212
  %v239 = vadd.f32 %v62, %v215
  %v240 = vadd.f32 %v63, %v220
  %v241 = vadd.f32 %v64, %v223
  %242 = vst [vmem:[%s3] sm:$0xff] %v226
  %243 = vst [vmem:[%s3 + $0x8] sm:$0xff] %v227
  %244 = vst [vmem:[%s3 + $0x10] sm:$0xff] %v228
  %245 = vst [vmem:[%s3 + $0x18] sm:$0xff] %v229
  %246 = vst [vmem:[%s3 + $0x20] sm:$0xff] %v230
  %247 = vst [vmem:[%s3 + $0x28] sm:$0xff] %v231
  %248 = vst [vmem:[%s3 + $0x30] sm:$0xff] %v232
  %249 = vst [vmem:[%s3 + $0x38] sm:$0xff] %v233
  %250 = vst [vmem:[%s3 + $0x40] sm:$0xff] %v234
  %251 = vst [vmem:[%s3 + $0x48] sm:$0xff] %v235
  %252 = vst [vmem:[%s3 + $0x50] sm:$0xff] %v236
  %253 = vst [vmem:[%s3 + $0x58] sm:$0xff] %v237
  %254 = vst [vmem:[%s3 + $0x60] sm:$0xff] %v238
  %255 = vst [vmem:[%s3 + $0x68] sm:$0xff] %v239
  %256 = vst [vmem:[%s3 + $0x70] sm:$0xff] %v240
  %257 = vst [vmem:[%s3 + $0x78] sm:$0xff] %v241
  // Predicated region
  $region18: #{lightgcn_forward.4} parent=0 // pred_check
    %p258 = pneg %p17
  $region19: #{lightgcn_forward.4} parent=0 // pred_check_branch
    %260 = sbr.rel (%p258) target = $region21
  $region20: #{lightgcn_forward.4} parent=0 // pred_region
    %v261 = vld [vmem:[%s2] sm:$0xff]
    %v262 = vld [vmem:[%s2 + $0x8] sm:$0xff]
    %v263 = vld [vmem:[%s2 + $0x10] sm:$0xff]
    %v264 = vld [vmem:[%s2 + $0x18] sm:$0xff]
    %v265 = vld [vmem:[%s2 + $0x20] sm:$0xff]
    %v266 = vld [vmem:[%s2 + $0x28] sm:$0xff]
    %v267 = vld [vmem:[%s2 + $0x30] sm:$0xff]
    %v268 = vld [vmem:[%s2 + $0x38] sm:$0xff]
    %v269 = vld [vmem:[%s2 + $0x40] sm:$0xff]
    %v270 = vld [vmem:[%s2 + $0x48] sm:$0xff]
    %v271 = vld [vmem:[%s2 + $0x50] sm:$0xff]
    %v272 = vld [vmem:[%s2 + $0x58] sm:$0xff]
    %v273 = vld [vmem:[%s2 + $0x60] sm:$0xff]
    %v274 = vld [vmem:[%s2 + $0x68] sm:$0xff]
    %v275 = vld [vmem:[%s2 + $0x70] sm:$0xff]
    %v276 = vld [vmem:[%s2 + $0x78] sm:$0xff]
    %v277 = vld [vmem:[%s3] sm:$0xff]
    %v278 = vld [vmem:[%s3 + $0x8] sm:$0xff]
    %v279 = vld [vmem:[%s3 + $0x10] sm:$0xff]
    %v280 = vld [vmem:[%s3 + $0x18] sm:$0xff]
    %v281 = vld [vmem:[%s3 + $0x20] sm:$0xff]
    %v282 = vld [vmem:[%s3 + $0x28] sm:$0xff]
    %v283 = vld [vmem:[%s3 + $0x30] sm:$0xff]
    %v284 = vld [vmem:[%s3 + $0x38] sm:$0xff]
    %v285 = vld [vmem:[%s3 + $0x40] sm:$0xff]
    %v286 = vld [vmem:[%s3 + $0x48] sm:$0xff]
    %v287 = vld [vmem:[%s3 + $0x50] sm:$0xff]
    %v288 = vld [vmem:[%s3 + $0x58] sm:$0xff]
    %v289 = vld [vmem:[%s3 + $0x60] sm:$0xff]
    %v290 = vld [vmem:[%s3 + $0x68] sm:$0xff]
    %v291 = vld [vmem:[%s3 + $0x70] sm:$0xff]
    %v292 = vld [vmem:[%s3 + $0x78] sm:$0xff]
    %294 = vset.pattern.permute.xlu0 0
    %295 = vperm.xlu0 %294, %v261
    %v296 = vpop.permute.xlu0 %295
    %299 = vset.pattern.permute.xlu0 0
    %300 = vperm.xlu0 %299, %v262
    %v301 = vpop.permute.xlu0 %300
    %304 = vset.pattern.permute.xlu0 0
    %305 = vperm.xlu0 %304, %v263
    %v306 = vpop.permute.xlu0 %305
    %309 = vset.pattern.permute.xlu0 0
    %310 = vperm.xlu0 %309, %v264
    %v311 = vpop.permute.xlu0 %310
    %314 = vset.pattern.permute.xlu0 0
    %315 = vperm.xlu0 %314, %v265
    %v316 = vpop.permute.xlu0 %315
    %319 = vset.pattern.permute.xlu0 0
    %320 = vperm.xlu0 %319, %v266
    %v321 = vpop.permute.xlu0 %320
    %324 = vset.pattern.permute.xlu0 0
    %325 = vperm.xlu0 %324, %v267
    %v326 = vpop.permute.xlu0 %325
    %329 = vset.pattern.permute.xlu0 0
    %330 = vperm.xlu0 %329, %v268
    %v331 = vpop.permute.xlu0 %330
    %334 = vset.pattern.permute.xlu0 0
    %335 = vperm.xlu0 %334, %v269
    %v336 = vpop.permute.xlu0 %335
    %339 = vset.pattern.permute.xlu0 0
    %340 = vperm.xlu0 %339, %v270
    %v341 = vpop.permute.xlu0 %340
    %344 = vset.pattern.permute.xlu0 0
    %345 = vperm.xlu0 %344, %v271
    %v346 = vpop.permute.xlu0 %345
    %349 = vset.pattern.permute.xlu0 0
    %350 = vperm.xlu0 %349, %v272
    %v351 = vpop.permute.xlu0 %350
    %354 = vset.pattern.permute.xlu0 0
    %355 = vperm.xlu0 %354, %v273
    %v356 = vpop.permute.xlu0 %355
    %359 = vset.pattern.permute.xlu0 0
    %360 = vperm.xlu0 %359, %v274
    %v361 = vpop.permute.xlu0 %360
    %364 = vset.pattern.permute.xlu0 0
    %365 = vperm.xlu0 %364, %v275
    %v366 = vpop.permute.xlu0 %365
    %369 = vset.pattern.permute.xlu0 0
    %370 = vperm.xlu0 %369, %v276
    %v371 = vpop.permute.xlu0 %370
    %v373 = vmul.f32 %v277, %v296
    %v374 = vmul.f32 %v278, %v301
    %v375 = vmul.f32 %v279, %v306
    %v376 = vmul.f32 %v280, %v311
    %v377 = vmul.f32 %v281, %v316
    %v378 = vmul.f32 %v282, %v321
    %v379 = vmul.f32 %v283, %v326
    %v380 = vmul.f32 %v284, %v331
    %v381 = vmul.f32 %v285, %v336
    %v382 = vmul.f32 %v286, %v341
    %v383 = vmul.f32 %v287, %v346
    %v384 = vmul.f32 %v288, %v351
    %v385 = vmul.f32 %v289, %v356
    %v386 = vmul.f32 %v290, %v361
    %v387 = vmul.f32 %v291, %v366
    %v388 = vmul.f32 %v292, %v371
    %389 = vst [vmem:[%s3] sm:$0xff] %v373
    %390 = vst [vmem:[%s3 + $0x8] sm:$0xff] %v374
    %391 = vst [vmem:[%s3 + $0x10] sm:$0xff] %v375
    %392 = vst [vmem:[%s3 + $0x18] sm:$0xff] %v376
    %393 = vst [vmem:[%s3 + $0x20] sm:$0xff] %v377
    %394 = vst [vmem:[%s3 + $0x28] sm:$0xff] %v378
    %395 = vst [vmem:[%s3 + $0x30] sm:$0xff] %v379
    %396 = vst [vmem:[%s3 + $0x38] sm:$0xff] %v380
    %397 = vst [vmem:[%s3 + $0x40] sm:$0xff] %v381
    %398 = vst [vmem:[%s3 + $0x48] sm:$0xff] %v382
    %399 = vst [vmem:[%s3 + $0x50] sm:$0xff] %v383
    %400 = vst [vmem:[%s3 + $0x58] sm:$0xff] %v384
    %401 = vst [vmem:[%s3 + $0x60] sm:$0xff] %v385
    %402 = vst [vmem:[%s3 + $0x68] sm:$0xff] %v386
    %403 = vst [vmem:[%s3 + $0x70] sm:$0xff] %v387
    %404 = vst [vmem:[%s3 + $0x78] sm:$0xff] %v388
    %v405 = vmul.f32 %v373, %v296
    %v406 = vmul.f32 %v374, %v301
    %v407 = vmul.f32 %v375, %v306
    %v408 = vmul.f32 %v376, %v311
    %v409 = vmul.f32 %v377, %v316
    %v410 = vmul.f32 %v378, %v321
    %v411 = vmul.f32 %v379, %v326
    %v412 = vmul.f32 %v380, %v331
    %v413 = vmul.f32 %v381, %v336
    %v414 = vmul.f32 %v382, %v341
    %v415 = vmul.f32 %v383, %v346
    %v416 = vmul.f32 %v384, %v351
    %v417 = vmul.f32 %v385, %v356
    %v418 = vmul.f32 %v386, %v361
    %v419 = vmul.f32 %v387, %v366
    %v420 = vmul.f32 %v388, %v371
    %v421 = vpack.c.bf16 %v406, %v405
    %v422 = vpack.c.bf16 %v408, %v407
    %v423 = vpack.c.bf16 %v410, %v409
    %v424 = vpack.c.bf16 %v412, %v411
    %v425 = vpack.c.bf16 %v414, %v413
    %v426 = vpack.c.bf16 %v416, %v415
    %v427 = vpack.c.bf16 %v418, %v417
    %v428 = vpack.c.bf16 %v420, %v419
    %v437 = vunpack.c.l.b16 %v421
    %v438 = vunpack.c.h.b16 %v421
    %v439 = vunpack.c.l.b16 %v422
    %v440 = vunpack.c.h.b16 %v422
    %v441 = vunpack.c.l.b16 %v423
    %v442 = vunpack.c.h.b16 %v423
    %v443 = vunpack.c.l.b16 %v424
    %v444 = vunpack.c.h.b16 %v424
    %v445 = vunpack.c.l.b16 %v425
    %v446 = vunpack.c.h.b16 %v425
    %v447 = vunpack.c.l.b16 %v426
    %v448 = vunpack.c.h.b16 %v426
    %v449 = vunpack.c.l.b16 %v427
    %v450 = vunpack.c.h.b16 %v427
    %v451 = vunpack.c.l.b16 %v428
    %v452 = vunpack.c.h.b16 %v428
    %v453 = vpack.c.b16 %v437, %v437
    %v454 = vpack.c.b16 %v438, %v438
    %v455 = vpack.c.b16 %v439, %v439
    %v456 = vpack.c.b16 %v440, %v440
    %v457 = vpack.c.b16 %v441, %v441
    %v458 = vpack.c.b16 %v442, %v442
    %v459 = vpack.c.b16 %v443, %v443
    %v460 = vpack.c.b16 %v444, %v444
    %v461 = vpack.c.b16 %v445, %v445
    %v462 = vpack.c.b16 %v446, %v446
    %v463 = vpack.c.b16 %v447, %v447
    %v464 = vpack.c.b16 %v448, %v448
    %v465 = vpack.c.b16 %v449, %v449
    %v466 = vpack.c.b16 %v450, %v450
    %v467 = vpack.c.b16 %v451, %v451
    %v468 = vpack.c.b16 %v452, %v452
    %485 = vst [vmem:[%s4] sm:$0xf] %v453
    %486 = vst [vmem:[%s4 + $0x4] sm:$0xf] %v454
    %487 = vst [vmem:[%s4 + $0x8] sm:$0xf] %v455
    %488 = vst [vmem:[%s4 + $0xc] sm:$0xf] %v456
    %489 = vst [vmem:[%s4 + $0x10] sm:$0xf] %v457
    %490 = vst [vmem:[%s4 + $0x14] sm:$0xf] %v458
    %491 = vst [vmem:[%s4 + $0x18] sm:$0xf] %v459
    %492 = vst [vmem:[%s4 + $0x1c] sm:$0xf] %v460
    %493 = vst [vmem:[%s4 + $0x20] sm:$0xf] %v461
    %494 = vst [vmem:[%s4 + $0x24] sm:$0xf] %v462
    %495 = vst [vmem:[%s4 + $0x28] sm:$0xf] %v463
    %496 = vst [vmem:[%s4 + $0x2c] sm:$0xf] %v464
    %497 = vst [vmem:[%s4 + $0x30] sm:$0xf] %v465
    %498 = vst [vmem:[%s4 + $0x34] sm:$0xf] %v466
    %499 = vst [vmem:[%s4 + $0x38] sm:$0xf] %v467
    %500 = vst [vmem:[%s4 + $0x3c] sm:$0xf] %v468
  $region21: #{lightgcn_forward.4} parent=0 // pred_fallthru
    _
  // Predicated region
  $region22: #{lightgcn_forward.4} parent=0 // pred_check
    _
  $region23: #{lightgcn_forward.4} parent=0 // pred_check_branch
    %502 = sbr.rel (0) target = $region25
  $region24: #{lightgcn_forward.4} parent=0 // pred_region
    _
  $region25: #{lightgcn_forward.4} parent=0 // pred_fallthru
    _
  // Predicated region
  $region26: #{lightgcn_forward.4} parent=0 // pred_check
    _
  $region27: #{lightgcn_forward.4} parent=0 // pred_check_branch
    %504 = sbr.rel (0) target = $region29
  $region28: #{lightgcn_forward.4} parent=0 // pred_region
    _
  $region29: #{lightgcn_forward.4} parent=0 // pred_fallthru
    _
  // Predicated region
  $region30: #{lightgcn_forward.4} parent=0 // pred_check
    _
  $region31: #{lightgcn_forward.4} parent=0 // pred_check_branch
    %506 = sbr.rel (0) target = $region33
  $region32: #{lightgcn_forward.4} parent=0 // pred_region
    _
  $region33: #{lightgcn_forward.4} parent=0 // pred_fallthru
    _
  // Predicated region
  $region34: #{lightgcn_forward.4} parent=0 // pred_check
    _
  $region35: #{lightgcn_forward.4} parent=0 // pred_check_branch
    %508 = sbr.rel (0) target = $region37
  $region36: #{lightgcn_forward.4} parent=0 // pred_region
    _
  $region37: #{lightgcn_forward.4} parent=0 // pred_fallthru
    _

// kernel: lightgcn_forward.6
$region0: #{lightgcn_forward.6}
  #allocation0 [shape = 'u32[]', space=smem, size = 0x4, offset = 0x4, fixed_abs, tag = 'smem constant byte address 0x4 - core index']
  #allocation1 [shape = 'u32[144,128]{1,0:T(1,128)}', space=vmem, size = 0x12000, scoped, tag = 'internal scratch']
  %s0 = inlined_call_operand.vmem [shape: s8[128,128], index: 0, kind: input, shape index: {}]
  %s1 = inlined_call_operand.vmem [shape: bf16[128,128], index: 1, kind: input, shape index: {}]
  %s2 = inlined_call_operand.vmem [shape: f32[128,1], index: 2, kind: input, shape index: {}]
  %s3 = inlined_call_operand.vmem [shape: f32[128,128], index: 3, kind: output, shape index: {0}]
  %s4 = inlined_call_operand.hbm [shape: bf16[128,128], index: 4, kind: output, shape index: {1}]
  %5 = xla_tuple %s3, %s4
  %s6 = sld [smem:[#allocation0]]
  $region38: #{lightgcn_forward.6} parent=0
    _
  %s8 = ssub.s32 1, %s6
  %s9 = scalar_select 0, %s8, %s6
  $region1: #{lightgcn_forward.6} parent=0
    #allocation2 [shape = 'u8[32768]{0}', space=vmem, size = 0x8000, scoped, tag = 'output window, operand 1, single buffered']
    #allocation3 [shape = 's32[1]{0}', space=sflag, size = 0x4, scoped, tag = 'scoped memory for lightgcn_forward.6']
    %10 = vsyncpa [#allocation3], 0
    // Predicated region
    $region2: #{lightgcn_forward.6} parent=1 // pred_check
      _
    $region3: #{lightgcn_forward.6} parent=1 // pred_check_branch
      %12 = sbr.rel (0) target = $region5
    $region4: #{lightgcn_forward.6} parent=1 // pred_region
      _
    $region5: #{lightgcn_forward.6} parent=1 // pred_fallthru
      _
    // Predicated region
    $region6: #{lightgcn_forward.6} parent=1 // pred_check
      _
    $region7: #{lightgcn_forward.6} parent=1 // pred_check_branch
      %14 = sbr.rel (0) target = $region9
    $region8: #{lightgcn_forward.6} parent=1 // pred_region
      _
    $region9: #{lightgcn_forward.6} parent=1 // pred_fallthru
      _
    // Predicated region
    $region10: #{lightgcn_forward.6} parent=1 // pred_check
      _
    $region11: #{lightgcn_forward.6} parent=1 // pred_check_branch
      %16 = sbr.rel (0) target = $region13
    $region12: #{lightgcn_forward.6} parent=1 // pred_region
      _
    $region13: #{lightgcn_forward.6} parent=1 // pred_fallthru
      _
    %p18 = scmp.eq.s32.totalorder 0, 0
    // Predicated region
    $region14: #{lightgcn_forward.6} parent=1 // pred_check
      %p19 = pneg %p18
    $region15: #{lightgcn_forward.6} parent=1 // pred_check_branch
      %21 = sbr.rel (%p19) target = $region17
    $region16: #{lightgcn_forward.6} parent=1 // pred_region
      %22 = vst [vmem:[%s3] sm:$0xff] 0.0
      %23 = vst [vmem:[%s3 + $0x8] sm:$0xff] 0.0
      %24 = vst [vmem:[%s3 + $0x10] sm:$0xff] 0.0
      %25 = vst [vmem:[%s3 + $0x18] sm:$0xff] 0.0
      %26 = vst [vmem:[%s3 + $0x20] sm:$0xff] 0.0
      %27 = vst [vmem:[%s3 + $0x28] sm:$0xff] 0.0
      %28 = vst [vmem:[%s3 + $0x30] sm:$0xff] 0.0
      %29 = vst [vmem:[%s3 + $0x38] sm:$0xff] 0.0
      %30 = vst [vmem:[%s3 + $0x40] sm:$0xff] 0.0
      %31 = vst [vmem:[%s3 + $0x48] sm:$0xff] 0.0
      %32 = vst [vmem:[%s3 + $0x50] sm:$0xff] 0.0
      %33 = vst [vmem:[%s3 + $0x58] sm:$0xff] 0.0
      %34 = vst [vmem:[%s3 + $0x60] sm:$0xff] 0.0
      %35 = vst [vmem:[%s3 + $0x68] sm:$0xff] 0.0
      %36 = vst [vmem:[%s3 + $0x70] sm:$0xff] 0.0
      %37 = vst [vmem:[%s3 + $0x78] sm:$0xff] 0.0
    $region17: #{lightgcn_forward.6} parent=1 // pred_fallthru
      _
    %v38 = vld [vmem:[%s0] sm:$0xff]
    %v39 = vld [vmem:[%s0 + $0x8] sm:$0xff]
    %v40 = vld [vmem:[%s0 + $0x10] sm:$0xff]
    %v41 = vld [vmem:[%s0 + $0x18] sm:$0xff]
    %v42 = vunpack.c.l.s8.bf16 %v38
    %v43 = vunpack.c.h.s8.bf16 %v38
    %v44 = vunpack.c.l.s8.bf16 %v39
    %v45 = vunpack.c.h.s8.bf16 %v39
    %v46 = vunpack.c.l.s8.bf16 %v40
    %v47 = vunpack.c.h.s8.bf16 %v40
    %v48 = vunpack.c.l.s8.bf16 %v41
    %v49 = vunpack.c.h.s8.bf16 %v41
    %v50 = vld [vmem:[%s3] sm:$0xff]
    %v51 = vld [vmem:[%s3 + $0x8] sm:$0xff]
    %v52 = vld [vmem:[%s3 + $0x10] sm:$0xff]
    %v53 = vld [vmem:[%s3 + $0x18] sm:$0xff]
    %v54 = vld [vmem:[%s3 + $0x20] sm:$0xff]
    %v55 = vld [vmem:[%s3 + $0x28] sm:$0xff]
    %v56 = vld [vmem:[%s3 + $0x30] sm:$0xff]
    %v57 = vld [vmem:[%s3 + $0x38] sm:$0xff]
    %v58 = vld [vmem:[%s3 + $0x40] sm:$0xff]
    %v59 = vld [vmem:[%s3 + $0x48] sm:$0xff]
    %v60 = vld [vmem:[%s3 + $0x50] sm:$0xff]
    %v61 = vld [vmem:[%s3 + $0x58] sm:$0xff]
    %v62 = vld [vmem:[%s3 + $0x60] sm:$0xff]
    %v63 = vld [vmem:[%s3 + $0x68] sm:$0xff]
    %v64 = vld [vmem:[%s3 + $0x70] sm:$0xff]
    %v65 = vld [vmem:[%s3 + $0x78] sm:$0xff]
    %v66 = vld [vmem:[%s1] sm:$0xf]
    %v67 = vld [vmem:[%s1 + $0x4] sm:$0xf]
    %v68 = vld [vmem:[%s1 + $0x8] sm:$0xf]
    %v69 = vld [vmem:[%s1 + $0xc] sm:$0xf]
    %v70 = vld [vmem:[%s1 + $0x10] sm:$0xf]
    %v71 = vld [vmem:[%s1 + $0x14] sm:$0xf]
    %v72 = vld [vmem:[%s1 + $0x18] sm:$0xf]
    %v73 = vld [vmem:[%s1 + $0x1c] sm:$0xf]
    %v74 = vld [vmem:[%s1 + $0x20] sm:$0xf]
    %v75 = vld [vmem:[%s1 + $0x24] sm:$0xf]
    %v76 = vld [vmem:[%s1 + $0x28] sm:$0xf]
    %v77 = vld [vmem:[%s1 + $0x2c] sm:$0xf]
    %v78 = vld [vmem:[%s1 + $0x30] sm:$0xf]
    %v79 = vld [vmem:[%s1 + $0x34] sm:$0xf]
    %v80 = vld [vmem:[%s1 + $0x38] sm:$0xf]
    %v81 = vld [vmem:[%s1 + $0x3c] sm:$0xf]
    %v98 = vunpack.c.l.b16 %v66
    %v99 = vunpack.c.l.b16 %v67
    %v100 = vunpack.c.l.b16 %v68
    %v101 = vunpack.c.l.b16 %v69
    %v102 = vunpack.c.l.b16 %v70
    %v103 = vunpack.c.l.b16 %v71
    %v104 = vunpack.c.l.b16 %v72
    %v105 = vunpack.c.l.b16 %v73
    %v106 = vunpack.c.l.b16 %v74
    %v107 = vunpack.c.l.b16 %v75
    %v108 = vunpack.c.l.b16 %v76
    %v109 = vunpack.c.l.b16 %v77
    %v110 = vunpack.c.l.b16 %v78
    %v111 = vunpack.c.l.b16 %v79
    %v112 = vunpack.c.l.b16 %v80
    %v113 = vunpack.c.l.b16 %v81
    %v114 = vpack.c.b16 %v99, %v98
    %v115 = vpack.c.b16 %v101, %v100
    %v116 = vpack.c.b16 %v103, %v102
    %v117 = vpack.c.b16 %v105, %v104
    %v118 = vpack.c.b16 %v107, %v106
    %v119 = vpack.c.b16 %v109, %v108
    %v120 = vpack.c.b16 %v111, %v110
    %v121 = vpack.c.b16 %v113, %v112
    %130 = vmatprep.subr.bf16.mxu0 0
    %131 = vmatpush1.bf16.msra.mxu0 %v114
    %132 = vmatprep.subr.bf16.mxu0 0
    %133 = vmatpush1.bf16.msra.mxu0 %v115
    %134 = vmatprep.subr.bf16.mxu0 0
    %135 = vmatpush1.bf16.msra.mxu0 %v116
    %136 = vmatprep.subr.bf16.mxu0 0
    %137 = vmatpush1.bf16.msra.mxu0 %v117
    %138 = vmatprep.subr.bf16.mxu0 0
    %139 = vmatpush1.bf16.msra.mxu0 %v118
    %140 = vmatprep.subr.bf16.mxu0 0
    %141 = vmatpush1.bf16.msra.mxu0 %v119
    %142 = vmatprep.subr.bf16.mxu0 0
    %143 = vmatpush1.bf16.msra.mxu0 %v120
    %144 = vmatprep.subr.bf16.mxu0 0
    %145 = vmatpush1.bf16.msra.mxu0 %v121
    %146 = vmatprep.subr.bf16.mxu0 0
    %147 = vmatpush1.bf16.msra.mxu0 0
    %148 = vmatprep.subr.bf16.mxu0 0
    %149 = vmatpush1.bf16.msra.mxu0 0
    %150 = vmatprep.subr.bf16.mxu0 0
    %151 = vmatpush1.bf16.msra.mxu0 0
    %152 = vmatprep.subr.bf16.mxu0 0
    %153 = vmatpush1.bf16.msra.mxu0 0
    %154 = vmatprep.subr.bf16.mxu0 0
    %155 = vmatpush1.bf16.msra.mxu0 0
    %156 = vmatprep.subr.bf16.mxu0 0
    %157 = vmatpush1.bf16.msra.mxu0 0
    %158 = vmatprep.subr.bf16.mxu0 0
    %159 = vmatpush1.bf16.msra.mxu0 0
    %160 = vmatprep.subr.bf16.mxu0 0
    %161 = vmatpush1.bf16.msra.mxu0 0
    %162 = vmatprep.mubr.bf16.mxu0 0
    %163 = vmatmul.mubr.bf16.gmra.mrb[0].mxu0 %v42
    %v164 = vpop.f32.mrb[0].mxu0
    %v165 = vadd.f32 0.0, %v164
    %v166 = vpop.f32.mrb[0].mxu0
    %v167 = vpop.f32.mrb[0].mxu0
    %v168 = vadd.f32 0.0, %v167
    %v169 = vpop.f32.mrb[0].mxu0
    %170 = vmatprep.mubr.bf16.mxu0 0
    %171 = vmatmul.mubr.bf16.gmra.mrb[0].mxu0 %v43
    %v172 = vpop.f32.mrb[0].mxu0
    %v173 = vadd.f32 0.0, %v172
    %v174 = vpop.f32.mrb[0].mxu0
    %v175 = vpop.f32.mrb[0].mxu0
    %v176 = vadd.f32 0.0, %v175
    %v177 = vpop.f32.mrb[0].mxu0
    %178 = vmatprep.mubr.bf16.mxu0 0
    %179 = vmatmul.mubr.bf16.gmra.mrb[0].mxu0 %v44
    %v180 = vpop.f32.mrb[0].mxu0
    %v181 = vadd.f32 0.0, %v180
    %v182 = vpop.f32.mrb[0].mxu0
    %v183 = vpop.f32.mrb[0].mxu0
    %v184 = vadd.f32 0.0, %v183
    %v185 = vpop.f32.mrb[0].mxu0
    %186 = vmatprep.mubr.bf16.mxu0 0
    %187 = vmatmul.mubr.bf16.gmra.mrb[0].mxu0 %v45
    %v188 = vpop.f32.mrb[0].mxu0
    %v189 = vadd.f32 0.0, %v188
    %v190 = vpop.f32.mrb[0].mxu0
    %v191 = vpop.f32.mrb[0].mxu0
    %v192 = vadd.f32 0.0, %v191
    %v193 = vpop.f32.mrb[0].mxu0
    %194 = vmatprep.mubr.bf16.mxu0 0
    %195 = vmatmul.mubr.bf16.gmra.mrb[0].mxu0 %v46
    %v196 = vpop.f32.mrb[0].mxu0
    %v197 = vadd.f32 0.0, %v196
    %v198 = vpop.f32.mrb[0].mxu0
    %v199 = vpop.f32.mrb[0].mxu0
    %v200 = vadd.f32 0.0, %v199
    %v201 = vpop.f32.mrb[0].mxu0
    %202 = vmatprep.mubr.bf16.mxu0 0
    %203 = vmatmul.mubr.bf16.gmra.mrb[0].mxu0 %v47
    %v204 = vpop.f32.mrb[0].mxu0
    %v205 = vadd.f32 0.0, %v204
    %v206 = vpop.f32.mrb[0].mxu0
    %v207 = vpop.f32.mrb[0].mxu0
    %v208 = vadd.f32 0.0, %v207
    %v209 = vpop.f32.mrb[0].mxu0
    %210 = vmatprep.mubr.bf16.mxu0 0
    %211 = vmatmul.mubr.bf16.gmra.mrb[0].mxu0 %v48
    %v212 = vpop.f32.mrb[0].mxu0
    %v213 = vadd.f32 0.0, %v212
    %v214 = vpop.f32.mrb[0].mxu0
    %v215 = vpop.f32.mrb[0].mxu0
    %v216 = vadd.f32 0.0, %v215
    %v217 = vpop.f32.mrb[0].mxu0
    %218 = vmatprep.mubr.bf16.mxu0 0
    %219 = vmatmul.mubr.bf16.gmra.mrb[0].mxu0 %v49
    %v220 = vpop.f32.mrb[0].mxu0
    %v221 = vadd.f32 0.0, %v220
    %v222 = vpop.f32.mrb[0].mxu0
    %v223 = vpop.f32.mrb[0].mxu0
    %v224 = vadd.f32 0.0, %v223
    %v225 = vpop.f32.mrb[0].mxu0
    %226 = vdwg.mxu0
    %v227 = vadd.f32 %v50, %v165
    %v228 = vadd.f32 %v51, %v168
    %v229 = vadd.f32 %v52, %v173
    %v230 = vadd.f32 %v53, %v176
    %v231 = vadd.f32 %v54, %v181
    %v232 = vadd.f32 %v55, %v184
    %v233 = vadd.f32 %v56, %v189
    %v234 = vadd.f32 %v57, %v192
    %v235 = vadd.f32 %v58, %v197
    %v236 = vadd.f32 %v59, %v200
    %v237 = vadd.f32 %v60, %v205
    %v238 = vadd.f32 %v61, %v208
    %v239 = vadd.f32 %v62, %v213
    %v240 = vadd.f32 %v63, %v216
    %v241 = vadd.f32 %v64, %v221
    %v242 = vadd.f32 %v65, %v224
    %243 = vst [vmem:[%s3] sm:$0xff] %v227
    %244 = vst [vmem:[%s3 + $0x8] sm:$0xff] %v228
    %245 = vst [vmem:[%s3 + $0x10] sm:$0xff] %v229
    %246 = vst [vmem:[%s3 + $0x18] sm:$0xff] %v230
    %247 = vst [vmem:[%s3 + $0x20] sm:$0xff] %v231
    %248 = vst [vmem:[%s3 + $0x28] sm:$0xff] %v232
    %249 = vst [vmem:[%s3 + $0x30] sm:$0xff] %v233
    %250 = vst [vmem:[%s3 + $0x38] sm:$0xff] %v234
    %251 = vst [vmem:[%s3 + $0x40] sm:$0xff] %v235
    %252 = vst [vmem:[%s3 + $0x48] sm:$0xff] %v236
    %253 = vst [vmem:[%s3 + $0x50] sm:$0xff] %v237
    %254 = vst [vmem:[%s3 + $0x58] sm:$0xff] %v238
    %255 = vst [vmem:[%s3 + $0x60] sm:$0xff] %v239
    %256 = vst [vmem:[%s3 + $0x68] sm:$0xff] %v240
    %257 = vst [vmem:[%s3 + $0x70] sm:$0xff] %v241
    %258 = vst [vmem:[%s3 + $0x78] sm:$0xff] %v242
    // Predicated region
    $region18: #{lightgcn_forward.6} parent=1 // pred_check
      %p259 = pneg %p18
    $region19: #{lightgcn_forward.6} parent=1 // pred_check_branch
      %261 = sbr.rel (%p259) target = $region21
    $region20: #{lightgcn_forward.6} parent=1 // pred_region
      %v262 = vld [vmem:[%s2] sm:$0xff]
      %v263 = vld [vmem:[%s2 + $0x8] sm:$0xff]
      %v264 = vld [vmem:[%s2 + $0x10] sm:$0xff]
      %v265 = vld [vmem:[%s2 + $0x18] sm:$0xff]
      %v266 = vld [vmem:[%s2 + $0x20] sm:$0xff]
      %v267 = vld [vmem:[%s2 + $0x28] sm:$0xff]
      %v268 = vld [vmem:[%s2 + $0x30] sm:$0xff]
      %v269 = vld [vmem:[%s2 + $0x38] sm:$0xff]
      %v270 = vld [vmem:[%s2 + $0x40] sm:$0xff]
      %v271 = vld [vmem:[%s2 + $0x48] sm:$0xff]
      %v272 = vld [vmem:[%s2 + $0x50] sm:$0xff]
      %v273 = vld [vmem:[%s2 + $0x58] sm:$0xff]
      %v274 = vld [vmem:[%s2 + $0x60] sm:$0xff]
      %v275 = vld [vmem:[%s2 + $0x68] sm:$0xff]
      %v276 = vld [vmem:[%s2 + $0x70] sm:$0xff]
      %v277 = vld [vmem:[%s2 + $0x78] sm:$0xff]
      %v278 = vld [vmem:[%s3] sm:$0xff]
      %v279 = vld [vmem:[%s3 + $0x8] sm:$0xff]
      %v280 = vld [vmem:[%s3 + $0x10] sm:$0xff]
      %v281 = vld [vmem:[%s3 + $0x18] sm:$0xff]
      %v282 = vld [vmem:[%s3 + $0x20] sm:$0xff]
      %v283 = vld [vmem:[%s3 + $0x28] sm:$0xff]
      %v284 = vld [vmem:[%s3 + $0x30] sm:$0xff]
      %v285 = vld [vmem:[%s3 + $0x38] sm:$0xff]
      %v286 = vld [vmem:[%s3 + $0x40] sm:$0xff]
      %v287 = vld [vmem:[%s3 + $0x48] sm:$0xff]
      %v288 = vld [vmem:[%s3 + $0x50] sm:$0xff]
      %v289 = vld [vmem:[%s3 + $0x58] sm:$0xff]
      %v290 = vld [vmem:[%s3 + $0x60] sm:$0xff]
      %v291 = vld [vmem:[%s3 + $0x68] sm:$0xff]
      %v292 = vld [vmem:[%s3 + $0x70] sm:$0xff]
      %v293 = vld [vmem:[%s3 + $0x78] sm:$0xff]
      %295 = vset.pattern.permute.xlu0 0
      %296 = vperm.xlu0 %295, %v262
      %v297 = vpop.permute.xlu0 %296
      %300 = vset.pattern.permute.xlu0 0
      %301 = vperm.xlu0 %300, %v263
      %v302 = vpop.permute.xlu0 %301
      %305 = vset.pattern.permute.xlu0 0
      %306 = vperm.xlu0 %305, %v264
      %v307 = vpop.permute.xlu0 %306
      %310 = vset.pattern.permute.xlu0 0
      %311 = vperm.xlu0 %310, %v265
      %v312 = vpop.permute.xlu0 %311
      %315 = vset.pattern.permute.xlu0 0
      %316 = vperm.xlu0 %315, %v266
      %v317 = vpop.permute.xlu0 %316
      %320 = vset.pattern.permute.xlu0 0
      %321 = vperm.xlu0 %320, %v267
      %v322 = vpop.permute.xlu0 %321
      %325 = vset.pattern.permute.xlu0 0
      %326 = vperm.xlu0 %325, %v268
      %v327 = vpop.permute.xlu0 %326
      %330 = vset.pattern.permute.xlu0 0
      %331 = vperm.xlu0 %330, %v269
      %v332 = vpop.permute.xlu0 %331
      %335 = vset.pattern.permute.xlu0 0
      %336 = vperm.xlu0 %335, %v270
      %v337 = vpop.permute.xlu0 %336
      %340 = vset.pattern.permute.xlu0 0
      %341 = vperm.xlu0 %340, %v271
      %v342 = vpop.permute.xlu0 %341
      %345 = vset.pattern.permute.xlu0 0
      %346 = vperm.xlu0 %345, %v272
      %v347 = vpop.permute.xlu0 %346
      %350 = vset.pattern.permute.xlu0 0
      %351 = vperm.xlu0 %350, %v273
      %v352 = vpop.permute.xlu0 %351
      %355 = vset.pattern.permute.xlu0 0
      %356 = vperm.xlu0 %355, %v274
      %v357 = vpop.permute.xlu0 %356
      %360 = vset.pattern.permute.xlu0 0
      %361 = vperm.xlu0 %360, %v275
      %v362 = vpop.permute.xlu0 %361
      %365 = vset.pattern.permute.xlu0 0
      %366 = vperm.xlu0 %365, %v276
      %v367 = vpop.permute.xlu0 %366
      %370 = vset.pattern.permute.xlu0 0
      %371 = vperm.xlu0 %370, %v277
      %v372 = vpop.permute.xlu0 %371
      %v374 = vmul.f32 %v278, %v297
      %v375 = vmul.f32 %v279, %v302
      %v376 = vmul.f32 %v280, %v307
      %v377 = vmul.f32 %v281, %v312
      %v378 = vmul.f32 %v282, %v317
      %v379 = vmul.f32 %v283, %v322
      %v380 = vmul.f32 %v284, %v327
      %v381 = vmul.f32 %v285, %v332
      %v382 = vmul.f32 %v286, %v337
      %v383 = vmul.f32 %v287, %v342
      %v384 = vmul.f32 %v288, %v347
      %v385 = vmul.f32 %v289, %v352
      %v386 = vmul.f32 %v290, %v357
      %v387 = vmul.f32 %v291, %v362
      %v388 = vmul.f32 %v292, %v367
      %v389 = vmul.f32 %v293, %v372
      %390 = vst [vmem:[%s3] sm:$0xff] %v374
      %391 = vst [vmem:[%s3 + $0x8] sm:$0xff] %v375
      %392 = vst [vmem:[%s3 + $0x10] sm:$0xff] %v376
      %393 = vst [vmem:[%s3 + $0x18] sm:$0xff] %v377
      %394 = vst [vmem:[%s3 + $0x20] sm:$0xff] %v378
      %395 = vst [vmem:[%s3 + $0x28] sm:$0xff] %v379
      %396 = vst [vmem:[%s3 + $0x30] sm:$0xff] %v380
      %397 = vst [vmem:[%s3 + $0x38] sm:$0xff] %v381
      %398 = vst [vmem:[%s3 + $0x40] sm:$0xff] %v382
      %399 = vst [vmem:[%s3 + $0x48] sm:$0xff] %v383
      %400 = vst [vmem:[%s3 + $0x50] sm:$0xff] %v384
      %401 = vst [vmem:[%s3 + $0x58] sm:$0xff] %v385
      %402 = vst [vmem:[%s3 + $0x60] sm:$0xff] %v386
      %403 = vst [vmem:[%s3 + $0x68] sm:$0xff] %v387
      %404 = vst [vmem:[%s3 + $0x70] sm:$0xff] %v388
      %405 = vst [vmem:[%s3 + $0x78] sm:$0xff] %v389
      %v406 = vmul.f32 %v374, %v297
      %v407 = vmul.f32 %v375, %v302
      %v408 = vmul.f32 %v376, %v307
      %v409 = vmul.f32 %v377, %v312
      %v410 = vmul.f32 %v378, %v317
      %v411 = vmul.f32 %v379, %v322
      %v412 = vmul.f32 %v380, %v327
      %v413 = vmul.f32 %v381, %v332
      %v414 = vmul.f32 %v382, %v337
      %v415 = vmul.f32 %v383, %v342
      %v416 = vmul.f32 %v384, %v347
      %v417 = vmul.f32 %v385, %v352
      %v418 = vmul.f32 %v386, %v357
      %v419 = vmul.f32 %v387, %v362
      %v420 = vmul.f32 %v388, %v367
      %v421 = vmul.f32 %v389, %v372
      %v422 = vpack.c.bf16 %v407, %v406
      %v423 = vpack.c.bf16 %v409, %v408
      %v424 = vpack.c.bf16 %v411, %v410
      %v425 = vpack.c.bf16 %v413, %v412
      %v426 = vpack.c.bf16 %v415, %v414
      %v427 = vpack.c.bf16 %v417, %v416
      %v428 = vpack.c.bf16 %v419, %v418
      %v429 = vpack.c.bf16 %v421, %v420
      %v438 = vunpack.c.l.b16 %v422
      %v439 = vunpack.c.h.b16 %v422
      %v440 = vunpack.c.l.b16 %v423
      %v441 = vunpack.c.h.b16 %v423
      %v442 = vunpack.c.l.b16 %v424
      %v443 = vunpack.c.h.b16 %v424
      %v444 = vunpack.c.l.b16 %v425
      %v445 = vunpack.c.h.b16 %v425
      %v446 = vunpack.c.l.b16 %v426
      %v447 = vunpack.c.h.b16 %v426
      %v448 = vunpack.c.l.b16 %v427
      %v449 = vunpack.c.h.b16 %v427
      %v450 = vunpack.c.l.b16 %v428
      %v451 = vunpack.c.h.b16 %v428
      %v452 = vunpack.c.l.b16 %v429
      %v453 = vunpack.c.h.b16 %v429
      %v454 = vpack.c.b16 %v438, %v438
      %v455 = vpack.c.b16 %v439, %v439
      %v456 = vpack.c.b16 %v440, %v440
      %v457 = vpack.c.b16 %v441, %v441
      %v458 = vpack.c.b16 %v442, %v442
      %v459 = vpack.c.b16 %v443, %v443
      %v460 = vpack.c.b16 %v444, %v444
      %v461 = vpack.c.b16 %v445, %v445
      %v462 = vpack.c.b16 %v446, %v446
      %v463 = vpack.c.b16 %v447, %v447
      %v464 = vpack.c.b16 %v448, %v448
      %v465 = vpack.c.b16 %v449, %v449
      %v466 = vpack.c.b16 %v450, %v450
      %v467 = vpack.c.b16 %v451, %v451
      %v468 = vpack.c.b16 %v452, %v452
      %v469 = vpack.c.b16 %v453, %v453
      %486 = vst [vmem:[#allocation2] sm:$0xf] %v454
      %487 = vst [vmem:[#allocation2 + $0x4] sm:$0xf] %v455
      %488 = vst [vmem:[#allocation2 + $0x8] sm:$0xf] %v456
      %489 = vst [vmem:[#allocation2 + $0xc] sm:$0xf] %v457
      %490 = vst [vmem:[#allocation2 + $0x10] sm:$0xf] %v458
      %491 = vst [vmem:[#allocation2 + $0x14] sm:$0xf] %v459
      %492 = vst [vmem:[#allocation2 + $0x18] sm:$0xf] %v460
      %493 = vst [vmem:[#allocation2 + $0x1c] sm:$0xf] %v461
      %494 = vst [vmem:[#allocation2 + $0x20] sm:$0xf] %v462
      %495 = vst [vmem:[#allocation2 + $0x24] sm:$0xf] %v463
      %496 = vst [vmem:[#allocation2 + $0x28] sm:$0xf] %v464
      %497 = vst [vmem:[#allocation2 + $0x2c] sm:$0xf] %v465
      %498 = vst [vmem:[#allocation2 + $0x30] sm:$0xf] %v466
      %499 = vst [vmem:[#allocation2 + $0x34] sm:$0xf] %v467
      %500 = vst [vmem:[#allocation2 + $0x38] sm:$0xf] %v468
      %501 = vst [vmem:[#allocation2 + $0x3c] sm:$0xf] %v469
    $region21: #{lightgcn_forward.6} parent=1 // pred_fallthru
      _
    // Predicated region
    $region22: #{lightgcn_forward.6} parent=1 // pred_check
      _
    $region23: #{lightgcn_forward.6} parent=1 // pred_check_branch
      %503 = sbr.rel (0) target = $region25
    $region24: #{lightgcn_forward.6} parent=1 // pred_region
      _
    $region25: #{lightgcn_forward.6} parent=1 // pred_fallthru
      _
    // Predicated region
    $region26: #{lightgcn_forward.6} parent=1 // pred_check
      _
    $region27: #{lightgcn_forward.6} parent=1 // pred_check_branch
      %505 = sbr.rel (0) target = $region29
    $region28: #{lightgcn_forward.6} parent=1 // pred_region
      %s507 = ssub.s32 1024, 1024
      %508 = vsyncadd [#allocation3], %s507
      %s509 = sshll.u32 [#allocation2], 4
      %s510 = int_to_ptr.vmem [resolvable:$true] %s509
      %515 = dma.vmem_to_hbm [thread:$0]  %s510, 1024, %s4, [#allocation3], 64, 64, 4
    $region29: #{lightgcn_forward.6} parent=1 // pred_fallthru
      _
    // Predicated region
    $region30: #{lightgcn_forward.6} parent=1 // pred_check
      _
    $region31: #{lightgcn_forward.6} parent=1 // pred_check_branch
      %517 = sbr.rel (0) target = $region33
    $region32: #{lightgcn_forward.6} parent=1 // pred_region
      _
    $region33: #{lightgcn_forward.6} parent=1 // pred_fallthru
      _
    // Predicated region
    $region34: #{lightgcn_forward.6} parent=1 // pred_check
      _
    $region35: #{lightgcn_forward.6} parent=1 // pred_check_branch
      %519 = sbr.rel (0) target = $region37
    $region36: #{lightgcn_forward.6} parent=1 // pred_region
      %520 = dma.done [#allocation3], 1024
    $region37: #{lightgcn_forward.6} parent=1 // pred_fallthru
      _
    %521 = vsyncpa [#allocation3], 1

// kernel: lightgcn_forward.7
$region0: #{lightgcn_forward.7}
  #allocation0 [shape = 'u32[]', space=smem, size = 0x4, offset = 0x4, fixed_abs, tag = 'smem constant byte address 0x4 - core index']
  #allocation1 [shape = 'u32[144,128]{1,0:T(1,128)}', space=vmem, size = 0x12000, scoped, tag = 'internal scratch']
  #allocation2 [shape = 'f32[128,1,128]{2,1,0:T(1,128)}', space=vmem, size = 0x10000, scoped, tag = 'scratch operand']
  #allocation3 [shape = 'f32[128,1,128]{2,1,0:T(1,128)}', space=vmem, size = 0x10000, scoped, tag = 'scratch operand']
  #allocation4 [shape = 's32[2]{0}', space=sflag, size = 0x8, scoped, tag = 'scratch operand']
  #allocation5 [shape = 's32[1]{0}', space=sflag, size = 0x4, scoped, tag = 'scoped memory for lightgcn_forward.7']
  #allocation6 [shape = 'u8[512]{0}', space=smem, size = 0x200, scoped, tag = 'prefetched SMEM operand 0']
  #allocation7 [shape = 'u8[512]{0}', space=smem, size = 0x200, scoped, tag = 'prefetched SMEM operand 1']
  #allocation8 [shape = 's32[]', space=sflag, size = 0x4, offset = 0, fixed_abs, tag = 'sflag constant byte address 0x0 - dummy sync flag']
  #allocation9 [shape = 's32[]', space=sflag, size = 0x4, offset = 0, fixed_abs, tag = 'sflag constant byte address 0x0 - dummy sync flag']
  %s0 = inlined_call_operand.vmem [shape: s32[128], index: 0, kind: input, shape index: {}]
  %s1 = inlined_call_operand.vmem [shape: s32[128], index: 1, kind: input, shape index: {}]
  %s2 = inlined_call_operand.vmem [shape: f32[128,1,128], index: 2, kind: input, shape index: {}]
  %s3 = inlined_call_operand.vmem [shape: f32[128,1], index: 3, kind: output, shape index: {}]
  %s4 = sld [smem:[#allocation0]]
  $region84: #{lightgcn_forward.7} parent=0
    _
  %s6 = ssub.s32 1, %s4
  %s7 = scalar_select 0, %s6, %s4
  %s8 = sshll.u32 %s0, 4
  %s9 = int_to_ptr.vmem [resolvable:$true] %s8
  %11 = dma.vmem_to_smem %s9, 16, [#allocation6], [#allocation5]
  %s12 = sshll.u32 %s1, 4
  %s13 = int_to_ptr.vmem [resolvable:$true] %s12
  %15 = dma.vmem_to_smem %s13, 16, [#allocation7], [#allocation5]
  %16 = dma.done [#allocation5], 32
  %17 = sfence
  %s18 = smul.u32 0, 128
  loop: start=0, step=1, limit=128
  $region2: #{lightgcn_forward.7} parent=0 // loop_pre_header
    _
  $region3: #{lightgcn_forward.7} parent=0 // loop_header
    %s20 = sphi 0, %s24
    %p21 = scmp.ge.s32.totalorder %s20, 128
  $region4: #{lightgcn_forward.7} parent=0 // loop_header_branch
    %23 = sbr.rel (%p21) target = $region8
  $region5: #{lightgcn_forward.7} parent=0 // loop_body
    %s25 = sadd.s32 %s18, %s20
    %s26 = sld [smem:[#allocation6 + %s25]]
    %s27 = sld [smem:[#allocation7 + %s25]]
    %s28 = scalar_lea.vmem %s2, %s26
    %s29 = scalar_lea.vmem [#allocation2], %s20
    %p31 = scmp.lt.u32.totalorder 1, 8
    %p32 = pneg %p31
    // Predicated region
    $region9: #{lightgcn_forward.7} parent=5 // pred_check
      _
    $region10: #{lightgcn_forward.7} parent=5 // pred_check_branch
      %34 = sbr.rel (%p31) target = $region12
    $region11: #{lightgcn_forward.7} parent=5 // pred_region
      %s49 = sand.u32 1, 7
      %p50 = scmp.eq.s32.totalorder %s49, 0
      %p51 = pneg %p50
      // Predicated region
      $region24: #{lightgcn_forward.7} parent=11 // pred_check
        _
      $region25: #{lightgcn_forward.7} parent=11 // pred_check_branch
        %53 = sbr.rel (%p50) target = $region27
      $region26: #{lightgcn_forward.7} parent=11 // pred_region
        %s54 = sand.u32 1, 7
        %s55 = ssub.s32 1, %s54
        %s56 = scalar_lea.vmem %s28, %s55
        %s57 = ssub.s32 1, %s54
        %s58 = scalar_lea.vmem %s29, %s57 [#allocation2]
        %s59 = sshllo.u32 0, %s54
        loop: start=0, step=1, limit=1
        $region28: #{lightgcn_forward.7} parent=26 // loop_pre_header
          _
        $region29: #{lightgcn_forward.7} parent=26 // loop_header
          %s61 = sphi 0, %s65
          %p62 = scmp.ge.s32.totalorder %s61, 1
          %s66 = sphi %s56, %s56
          %s67 = sphi %s58, %s58
        $region30: #{lightgcn_forward.7} parent=26 // loop_header_branch
          %64 = sbr.rel (%p62) target = $region34
        $region31: #{lightgcn_forward.7} parent=26 // loop_body
          %v68 = vld [vmem:[%s66] sm:%s59]
          %69 = vst [vmem:[%s67] sm:%s59] %v68
        $region32: #{lightgcn_forward.7} parent=26 // loop_footer
          %s65 = sadd.s32 1, %s61
        $region33: #{lightgcn_forward.7} parent=26 // loop_footer_branch
          %60 = sbr.rel target = $region29
        $region34: #{lightgcn_forward.7} parent=26 // loop_exit
          _
      $region27: #{lightgcn_forward.7} parent=11 // pred_fallthru
        _
    $region12: #{lightgcn_forward.7} parent=5 // pred_fallthru
      _
    // Predicated region
    $region13: #{lightgcn_forward.7} parent=5 // pred_check
      %p35 = pneg %p31
    $region14: #{lightgcn_forward.7} parent=5 // pred_check_branch
      %37 = sbr.rel (%p35) target = $region16
    $region15: #{lightgcn_forward.7} parent=5 // pred_region
      %s38 = sshllo.u32 0, 1
      loop: start=0, step=1, limit=1
      $region17: #{lightgcn_forward.7} parent=15 // loop_pre_header
        _
      $region18: #{lightgcn_forward.7} parent=15 // loop_header
        %s40 = sphi 0, %s44
        %p41 = scmp.ge.s32.totalorder %s40, 1
        %s45 = sphi %s28, %s28
        %s46 = sphi %s29, %s29
      $region19: #{lightgcn_forward.7} parent=15 // loop_header_branch
        %43 = sbr.rel (%p41) target = $region23
      $region20: #{lightgcn_forward.7} parent=15 // loop_body
        %v47 = vld [vmem:[%s45] sm:%s38]
        %48 = vst [vmem:[%s46] sm:%s38] %v47
      $region21: #{lightgcn_forward.7} parent=15 // loop_footer
        %s44 = sadd.s32 1, %s40
      $region22: #{lightgcn_forward.7} parent=15 // loop_footer_branch
        %39 = sbr.rel target = $region18
      $region23: #{lightgcn_forward.7} parent=15 // loop_exit
        _
    $region16: #{lightgcn_forward.7} parent=5 // pred_fallthru
      _
    // Predicated region
    $region35: #{lightgcn_forward.7} parent=5 // pred_check
      _
    $region36: #{lightgcn_forward.7} parent=5 // pred_check_branch
      %72 = sbr.rel (0) target = $region38
    $region37: #{lightgcn_forward.7} parent=5 // pred_region
      %73 = vsyncadd [#allocation4], 16
    $region38: #{lightgcn_forward.7} parent=5 // pred_fallthru
      _
    %s74 = scalar_lea.vmem %s2, %s27
    %s75 = scalar_lea.vmem [#allocation3], %s20
    %s76 = scalar_lea.sflag [#allocation4], 1
    %p78 = scmp.lt.u32.totalorder 1, 8
    %p79 = pneg %p78
    // Predicated region
    $region39: #{lightgcn_forward.7} parent=5 // pred_check
      _
    $region40: #{lightgcn_forward.7} parent=5 // pred_check_branch
      %81 = sbr.rel (%p78) target = $region42
    $region41: #{lightgcn_forward.7} parent=5 // pred_region
      %s96 = sand.u32 1, 7
      %p97 = scmp.eq.s32.totalorder %s96, 0
      %p98 = pneg %p97
      // Predicated region
      $region54: #{lightgcn_forward.7} parent=41 // pred_check
        _
      $region55: #{lightgcn_forward.7} parent=41 // pred_check_branch
        %100 = sbr.rel (%p97) target = $region57
      $region56: #{lightgcn_forward.7} parent=41 // pred_region
        %s101 = sand.u32 1, 7
        %s102 = ssub.s32 1, %s101
        %s103 = scalar_lea.vmem %s74, %s102
        %s104 = ssub.s32 1, %s101
        %s105 = scalar_lea.vmem %s75, %s104 [#allocation3]
        %s106 = sshllo.u32 0, %s101
        loop: start=0, step=1, limit=1
        $region58: #{lightgcn_forward.7} parent=56 // loop_pre_header
          _
        $region59: #{lightgcn_forward.7} parent=56 // loop_header
          %s108 = sphi 0, %s112
          %p109 = scmp.ge.s32.totalorder %s108, 1
          %s113 = sphi %s103, %s103
          %s114 = sphi %s105, %s105
        $region60: #{lightgcn_forward.7} parent=56 // loop_header_branch
          %111 = sbr.rel (%p109) target = $region64
        $region61: #{lightgcn_forward.7} parent=56 // loop_body
          %v115 = vld [vmem:[%s113] sm:%s106]
          %116 = vst [vmem:[%s114] sm:%s106] %v115
        $region62: #{lightgcn_forward.7} parent=56 // loop_footer
          %s112 = sadd.s32 1, %s108
        $region63: #{lightgcn_forward.7} parent=56 // loop_footer_branch
          %107 = sbr.rel target = $region59
        $region64: #{lightgcn_forward.7} parent=56 // loop_exit
          _
      $region57: #{lightgcn_forward.7} parent=41 // pred_fallthru
        _
    $region42: #{lightgcn_forward.7} parent=5 // pred_fallthru
      _
    // Predicated region
    $region43: #{lightgcn_forward.7} parent=5 // pred_check
      %p82 = pneg %p78
    $region44: #{lightgcn_forward.7} parent=5 // pred_check_branch
      %84 = sbr.rel (%p82) target = $region46
    $region45: #{lightgcn_forward.7} parent=5 // pred_region
      %s85 = sshllo.u32 0, 1
      loop: start=0, step=1, limit=1
      $region47: #{lightgcn_forward.7} parent=45 // loop_pre_header
        _
      $region48: #{lightgcn_forward.7} parent=45 // loop_header
        %s87 = sphi 0, %s91
        %p88 = scmp.ge.s32.totalorder %s87, 1
        %s92 = sphi %s74, %s74
        %s93 = sphi %s75, %s75
      $region49: #{lightgcn_forward.7} parent=45 // loop_header_branch
        %90 = sbr.rel (%p88) target = $region53
      $region50: #{lightgcn_forward.7} parent=45 // loop_body
        %v94 = vld [vmem:[%s92] sm:%s85]
        %95 = vst [vmem:[%s93] sm:%s85] %v94
      $region51: #{lightgcn_forward.7} parent=45 // loop_footer
        %s91 = sadd.s32 1, %s87
      $region52: #{lightgcn_forward.7} parent=45 // loop_footer_branch
        %86 = sbr.rel target = $region48
      $region53: #{lightgcn_forward.7} parent=45 // loop_exit
        _
    $region46: #{lightgcn_forward.7} parent=5 // pred_fallthru
      _
    // Predicated region
    $region65: #{lightgcn_forward.7} parent=5 // pred_check
      _
    $region66: #{lightgcn_forward.7} parent=5 // pred_check_branch
      %119 = sbr.rel (0) target = $region68
    $region67: #{lightgcn_forward.7} parent=5 // pred_region
      %120 = vsyncadd %s76, 16
    $region68: #{lightgcn_forward.7} parent=5 // pred_fallthru
      _
  $region6: #{lightgcn_forward.7} parent=0 // loop_footer
    %s24 = sadd.s32 1, %s20
  $region7: #{lightgcn_forward.7} parent=0 // loop_footer_branch
    %19 = sbr.rel target = $region3
  $region8: #{lightgcn_forward.7} parent=0 // loop_exit
    _
  loop: start=0, step=1, limit=128
  $region69: #{lightgcn_forward.7} parent=0 // loop_pre_header
    _
  $region70: #{lightgcn_forward.7} parent=0 // loop_header
    %s122 = sphi 0, %s126
    %p123 = scmp.ge.s32.totalorder %s122, 128
  $region71: #{lightgcn_forward.7} parent=0 // loop_header_branch
    %125 = sbr.rel (%p123) target = $region75
  $region72: #{lightgcn_forward.7} parent=0 // loop_body
    %s127 = smul.u32 1, 1
    %s128 = sshll.u32 %s127, 4
    %129 = dma.done [#allocation4], %s128
    %s130 = scalar_lea.sflag [#allocation4], 1
    %s131 = sshll.u32 %s127, 4
    %132 = dma.done %s130, %s131
  $region73: #{lightgcn_forward.7} parent=0 // loop_footer
    %s126 = sadd.s32 1, %s122
  $region74: #{lightgcn_forward.7} parent=0 // loop_footer_branch
    %121 = sbr.rel target = $region70
  $region75: #{lightgcn_forward.7} parent=0 // loop_exit
    _
  %v133 = vld [vmem:[#allocation2] sm:$0x1]
  %v134 = vld [vmem:[#allocation2 + $0x1] sm:$0x1]
  %v135 = vld [vmem:[#allocation2 + $0x2] sm:$0x1]
  %v136 = vld [vmem:[#allocation2 + $0x3] sm:$0x1]
  %v137 = vld [vmem:[#allocation2 + $0x4] sm:$0x1]
  %v138 = vld [vmem:[#allocation2 + $0x5] sm:$0x1]
  %v139 = vld [vmem:[#allocation2 + $0x6] sm:$0x1]
  %v140 = vld [vmem:[#allocation2 + $0x7] sm:$0x1]
  %v141 = vld [vmem:[#allocation2 + $0x8] sm:$0x1]
  %v142 = vld [vmem:[#allocation2 + $0x9] sm:$0x1]
  %v143 = vld [vmem:[#allocation2 + $0xa] sm:$0x1]
  %v144 = vld [vmem:[#allocation2 + $0xb] sm:$0x1]
  %v145 = vld [vmem:[#allocation2 + $0xc] sm:$0x1]
  %v146 = vld [vmem:[#allocation2 + $0xd] sm:$0x1]
  %v147 = vld [vmem:[#allocation2 + $0xe] sm:$0x1]
  %v148 = vld [vmem:[#allocation2 + $0xf] sm:$0x1]
  %v149 = vld [vmem:[#allocation2 + $0x10] sm:$0x1]
  %v150 = vld [vmem:[#allocation2 + $0x11] sm:$0x1]
  %v151 = vld [vmem:[#allocation2 + $0x12] sm:$0x1]
  %v152 = vld [vmem:[#allocation2 + $0x13] sm:$0x1]
  %v153 = vld [vmem:[#allocation2 + $0x14] sm:$0x1]
  %v154 = vld [vmem:[#allocation2 + $0x15] sm:$0x1]
  %v155 = vld [vmem:[#allocation2 + $0x16] sm:$0x1]
  %v156 = vld [vmem:[#allocation2 + $0x17] sm:$0x1]
  %v157 = vld [vmem:[#allocation2 + $0x18] sm:$0x1]
  %v158 = vld [vmem:[#allocation2 + $0x19] sm:$0x1]
  %v159 = vld [vmem:[#allocation2 + $0x1a] sm:$0x1]
  %v160 = vld [vmem:[#allocation2 + $0x1b] sm:$0x1]
  %v161 = vld [vmem:[#allocation2 + $0x1c] sm:$0x1]
  %v162 = vld [vmem:[#allocation2 + $0x1d] sm:$0x1]
  %v163 = vld [vmem:[#allocation2 + $0x1e] sm:$0x1]
  %v164 = vld [vmem:[#allocation2 + $0x1f] sm:$0x1]
  %v165 = vld [vmem:[#allocation2 + $0x20] sm:$0x1]
  %v166 = vld [vmem:[#allocation2 + $0x21] sm:$0x1]
  %v167 = vld [vmem:[#allocation2 + $0x22] sm:$0x1]
  %v168 = vld [vmem:[#allocation2 + $0x23] sm:$0x1]
  %v169 = vld [vmem:[#allocation2 + $0x24] sm:$0x1]
  %v170 = vld [vmem:[#allocation2 + $0x25] sm:$0x1]
  %v171 = vld [vmem:[#allocation2 + $0x26] sm:$0x1]
  %v172 = vld [vmem:[#allocation2 + $0x27] sm:$0x1]
  %v173 = vld [vmem:[#allocation2 + $0x28] sm:$0x1]
  %v174 = vld [vmem:[#allocation2 + $0x29] sm:$0x1]
  %v175 = vld [vmem:[#allocation2 + $0x2a] sm:$0x1]
  %v176 = vld [vmem:[#allocation2 + $0x2b] sm:$0x1]
  %v177 = vld [vmem:[#allocation2 + $0x2c] sm:$0x1]
  %v178 = vld [vmem:[#allocation2 + $0x2d] sm:$0x1]
  %v179 = vld [vmem:[#allocation2 + $0x2e] sm:$0x1]
  %v180 = vld [vmem:[#allocation2 + $0x2f] sm:$0x1]
  %v181 = vld [vmem:[#allocation2 + $0x30] sm:$0x1]
  %v182 = vld [vmem:[#allocation2 + $0x31] sm:$0x1]
  %v183 = vld [vmem:[#allocation2 + $0x32] sm:$0x1]
  %v184 = vld [vmem:[#allocation2 + $0x33] sm:$0x1]
  %v185 = vld [vmem:[#allocation2 + $0x34] sm:$0x1]
  %v186 = vld [vmem:[#allocation2 + $0x35] sm:$0x1]
  %v187 = vld [vmem:[#allocation2 + $0x36] sm:$0x1]
  %v188 = vld [vmem:[#allocation2 + $0x37] sm:$0x1]
  %v189 = vld [vmem:[#allocation2 + $0x38] sm:$0x1]
  %v190 = vld [vmem:[#allocation2 + $0x39] sm:$0x1]
  %v191 = vld [vmem:[#allocation2 + $0x3a] sm:$0x1]
  %v192 = vld [vmem:[#allocation2 + $0x3b] sm:$0x1]
  %v193 = vld [vmem:[#allocation2 + $0x3c] sm:$0x1]
  %v194 = vld [vmem:[#allocation2 + $0x3d] sm:$0x1]
  %v195 = vld [vmem:[#allocation2 + $0x3e] sm:$0x1]
  %v196 = vld [vmem:[#allocation2 + $0x3f] sm:$0x1]
  %v197 = vld [vmem:[#allocation2 + $0x40] sm:$0x1]
  %v198 = vld [vmem:[#allocation2 + $0x41] sm:$0x1]
  %v199 = vld [vmem:[#allocation2 + $0x42] sm:$0x1]
  %v200 = vld [vmem:[#allocation2 + $0x43] sm:$0x1]
  %v201 = vld [vmem:[#allocation2 + $0x44] sm:$0x1]
  %v202 = vld [vmem:[#allocation2 + $0x45] sm:$0x1]
  %v203 = vld [vmem:[#allocation2 + $0x46] sm:$0x1]
  %v204 = vld [vmem:[#allocation2 + $0x47] sm:$0x1]
  %v205 = vld [vmem:[#allocation2 + $0x48] sm:$0x1]
  %v206 = vld [vmem:[#allocation2 + $0x49] sm:$0x1]
  %v207 = vld [vmem:[#allocation2 + $0x4a] sm:$0x1]
  %v208 = vld [vmem:[#allocation2 + $0x4b] sm:$0x1]
  %v209 = vld [vmem:[#allocation2 + $0x4c] sm:$0x1]
  %v210 = vld [vmem:[#allocation2 + $0x4d] sm:$0x1]
  %v211 = vld [vmem:[#allocation2 + $0x4e] sm:$0x1]
  %v212 = vld [vmem:[#allocation2 + $0x4f] sm:$0x1]
  %v213 = vld [vmem:[#allocation2 + $0x50] sm:$0x1]
  %v214 = vld [vmem:[#allocation2 + $0x51] sm:$0x1]
  %v215 = vld [vmem:[#allocation2 + $0x52] sm:$0x1]
  %v216 = vld [vmem:[#allocation2 + $0x53] sm:$0x1]
  %v217 = vld [vmem:[#allocation2 + $0x54] sm:$0x1]
  %v218 = vld [vmem:[#allocation2 + $0x55] sm:$0x1]
  %v219 = vld [vmem:[#allocation2 + $0x56] sm:$0x1]
  %v220 = vld [vmem:[#allocation2 + $0x57] sm:$0x1]
  %v221 = vld [vmem:[#allocation2 + $0x58] sm:$0x1]
  %v222 = vld [vmem:[#allocation2 + $0x59] sm:$0x1]
  %v223 = vld [vmem:[#allocation2 + $0x5a] sm:$0x1]
  %v224 = vld [vmem:[#allocation2 + $0x5b] sm:$0x1]
  %v225 = vld [vmem:[#allocation2 + $0x5c] sm:$0x1]
  %v226 = vld [vmem:[#allocation2 + $0x5d] sm:$0x1]
  %v227 = vld [vmem:[#allocation2 + $0x5e] sm:$0x1]
  %v228 = vld [vmem:[#allocation2 + $0x5f] sm:$0x1]
  %v229 = vld [vmem:[#allocation2 + $0x60] sm:$0x1]
  %v230 = vld [vmem:[#allocation2 + $0x61] sm:$0x1]
  %v231 = vld [vmem:[#allocation2 + $0x62] sm:$0x1]
  %v232 = vld [vmem:[#allocation2 + $0x63] sm:$0x1]
  %v233 = vld [vmem:[#allocation2 + $0x64] sm:$0x1]
  %v234 = vld [vmem:[#allocation2 + $0x65] sm:$0x1]
  %v235 = vld [vmem:[#allocation2 + $0x66] sm:$0x1]
  %v236 = vld [vmem:[#allocation2 + $0x67] sm:$0x1]
  %v237 = vld [vmem:[#allocation2 + $0x68] sm:$0x1]
  %v238 = vld [vmem:[#allocation2 + $0x69] sm:$0x1]
  %v239 = vld [vmem:[#allocation2 + $0x6a] sm:$0x1]
  %v240 = vld [vmem:[#allocation2 + $0x6b] sm:$0x1]
  %v241 = vld [vmem:[#allocation2 + $0x6c] sm:$0x1]
  %v242 = vld [vmem:[#allocation2 + $0x6d] sm:$0x1]
  %v243 = vld [vmem:[#allocation2 + $0x6e] sm:$0x1]
  %v244 = vld [vmem:[#allocation2 + $0x6f] sm:$0x1]
  %v245 = vld [vmem:[#allocation2 + $0x70] sm:$0x1]
  %v246 = vld [vmem:[#allocation2 + $0x71] sm:$0x1]
  %v247 = vld [vmem:[#allocation2 + $0x72] sm:$0x1]
  %v248 = vld [vmem:[#allocation2 + $0x73] sm:$0x1]
  %v249 = vld [vmem:[#allocation2 + $0x74] sm:$0x1]
  %v250 = vld [vmem:[#allocation2 + $0x75] sm:$0x1]
  %v251 = vld [vmem:[#allocation2 + $0x76] sm:$0x1]
  %v252 = vld [vmem:[#allocation2 + $0x77] sm:$0x1]
  %v253 = vld [vmem:[#allocation2 + $0x78] sm:$0x1]
  %v254 = vld [vmem:[#allocation2 + $0x79] sm:$0x1]
  %v255 = vld [vmem:[#allocation2 + $0x7a] sm:$0x1]
  %v256 = vld [vmem:[#allocation2 + $0x7b] sm:$0x1]
  %v257 = vld [vmem:[#allocation2 + $0x7c] sm:$0x1]
  %v258 = vld [vmem:[#allocation2 + $0x7d] sm:$0x1]
  %v259 = vld [vmem:[#allocation2 + $0x7e] sm:$0x1]
  %v260 = vld [vmem:[#allocation2 + $0x7f] sm:$0x1]
  %v261 = vld [vmem:[#allocation3] sm:$0x1]
  %v262 = vld [vmem:[#allocation3 + $0x1] sm:$0x1]
  %v263 = vld [vmem:[#allocation3 + $0x2] sm:$0x1]
  %v264 = vld [vmem:[#allocation3 + $0x3] sm:$0x1]
  %v265 = vld [vmem:[#allocation3 + $0x4] sm:$0x1]
  %v266 = vld [vmem:[#allocation3 + $0x5] sm:$0x1]
  %v267 = vld [vmem:[#allocation3 + $0x6] sm:$0x1]
  %v268 = vld [vmem:[#allocation3 + $0x7] sm:$0x1]
  %v269 = vld [vmem:[#allocation3 + $0x8] sm:$0x1]
  %v270 = vld [vmem:[#allocation3 + $0x9] sm:$0x1]
  %v271 = vld [vmem:[#allocation3 + $0xa] sm:$0x1]
  %v272 = vld [vmem:[#allocation3 + $0xb] sm:$0x1]
  %v273 = vld [vmem:[#allocation3 + $0xc] sm:$0x1]
  %v274 = vld [vmem:[#allocation3 + $0xd] sm:$0x1]
  %v275 = vld [vmem:[#allocation3 + $0xe] sm:$0x1]
  %v276 = vld [vmem:[#allocation3 + $0xf] sm:$0x1]
  %v277 = vld [vmem:[#allocation3 + $0x10] sm:$0x1]
  %v278 = vld [vmem:[#allocation3 + $0x11] sm:$0x1]
  %v279 = vld [vmem:[#allocation3 + $0x12] sm:$0x1]
  %v280 = vld [vmem:[#allocation3 + $0x13] sm:$0x1]
  %v281 = vld [vmem:[#allocation3 + $0x14] sm:$0x1]
  %v282 = vld [vmem:[#allocation3 + $0x15] sm:$0x1]
  %v283 = vld [vmem:[#allocation3 + $0x16] sm:$0x1]
  %v284 = vld [vmem:[#allocation3 + $0x17] sm:$0x1]
  %v285 = vld [vmem:[#allocation3 + $0x18] sm:$0x1]
  %v286 = vld [vmem:[#allocation3 + $0x19] sm:$0x1]
  %v287 = vld [vmem:[#allocation3 + $0x1a] sm:$0x1]
  %v288 = vld [vmem:[#allocation3 + $0x1b] sm:$0x1]
  %v289 = vld [vmem:[#allocation3 + $0x1c] sm:$0x1]
  %v290 = vld [vmem:[#allocation3 + $0x1d] sm:$0x1]
  %v291 = vld [vmem:[#allocation3 + $0x1e] sm:$0x1]
  %v292 = vld [vmem:[#allocation3 + $0x1f] sm:$0x1]
  %v293 = vld [vmem:[#allocation3 + $0x20] sm:$0x1]
  %v294 = vld [vmem:[#allocation3 + $0x21] sm:$0x1]
  %v295 = vld [vmem:[#allocation3 + $0x22] sm:$0x1]
  %v296 = vld [vmem:[#allocation3 + $0x23] sm:$0x1]
  %v297 = vld [vmem:[#allocation3 + $0x24] sm:$0x1]
  %v298 = vld [vmem:[#allocation3 + $0x25] sm:$0x1]
  %v299 = vld [vmem:[#allocation3 + $0x26] sm:$0x1]
  %v300 = vld [vmem:[#allocation3 + $0x27] sm:$0x1]
  %v301 = vld [vmem:[#allocation3 + $0x28] sm:$0x1]
  %v302 = vld [vmem:[#allocation3 + $0x29] sm:$0x1]
  %v303 = vld [vmem:[#allocation3 + $0x2a] sm:$0x1]
  %v304 = vld [vmem:[#allocation3 + $0x2b] sm:$0x1]
  %v305 = vld [vmem:[#allocation3 + $0x2c] sm:$0x1]
  %v306 = vld [vmem:[#allocation3 + $0x2d] sm:$0x1]
  %v307 = vld [vmem:[#allocation3 + $0x2e] sm:$0x1]
  %v308 = vld [vmem:[#allocation3 + $0x2f] sm:$0x1]
  %v309 = vld [vmem:[#allocation3 + $0x30] sm:$0x1]
  %v310 = vld [vmem:[#allocation3 + $0x31] sm:$0x1]
  %v311 = vld [vmem:[#allocation3 + $0x32] sm:$0x1]
  %v312 = vld [vmem:[#allocation3 + $0x33] sm:$0x1]
  %v313 = vld [vmem:[#allocation3 + $0x34] sm:$0x1]
  %v314 = vld [vmem:[#allocation3 + $0x35] sm:$0x1]
  %v315 = vld [vmem:[#allocation3 + $0x36] sm:$0x1]
  %v316 = vld [vmem:[#allocation3 + $0x37] sm:$0x1]
  %v317 = vld [vmem:[#allocation3 + $0x38] sm:$0x1]
  %v318 = vld [vmem:[#allocation3 + $0x39] sm:$0x1]
  %v319 = vld [vmem:[#allocation3 + $0x3a] sm:$0x1]
  %v320 = vld [vmem:[#allocation3 + $0x3b] sm:$0x1]
  %v321 = vld [vmem:[#allocation3 + $0x3c] sm:$0x1]
  %v322 = vld [vmem:[#allocation3 + $0x3d] sm:$0x1]
  %v323 = vld [vmem:[#allocation3 + $0x3e] sm:$0x1]
  %v324 = vld [vmem:[#allocation3 + $0x3f] sm:$0x1]
  %v325 = vld [vmem:[#allocation3 + $0x40] sm:$0x1]
  %v326 = vld [vmem:[#allocation3 + $0x41] sm:$0x1]
  %v327 = vld [vmem:[#allocation3 + $0x42] sm:$0x1]
  %v328 = vld [vmem:[#allocation3 + $0x43] sm:$0x1]
  %v329 = vld [vmem:[#allocation3 + $0x44] sm:$0x1]
  %v330 = vld [vmem:[#allocation3 + $0x45] sm:$0x1]
  %v331 = vld [vmem:[#allocation3 + $0x46] sm:$0x1]
  %v332 = vld [vmem:[#allocation3 + $0x47] sm:$0x1]
  %v333 = vld [vmem:[#allocation3 + $0x48] sm:$0x1]
  %v334 = vld [vmem:[#allocation3 + $0x49] sm:$0x1]
  %v335 = vld [vmem:[#allocation3 + $0x4a] sm:$0x1]
  %v336 = vld [vmem:[#allocation3 + $0x4b] sm:$0x1]
  %v337 = vld [vmem:[#allocation3 + $0x4c] sm:$0x1]
  %v338 = vld [vmem:[#allocation3 + $0x4d] sm:$0x1]
  %v339 = vld [vmem:[#allocation3 + $0x4e] sm:$0x1]
  %v340 = vld [vmem:[#allocation3 + $0x4f] sm:$0x1]
  %v341 = vld [vmem:[#allocation3 + $0x50] sm:$0x1]
  %v342 = vld [vmem:[#allocation3 + $0x51] sm:$0x1]
  %v343 = vld [vmem:[#allocation3 + $0x52] sm:$0x1]
  %v344 = vld [vmem:[#allocation3 + $0x53] sm:$0x1]
  %v345 = vld [vmem:[#allocation3 + $0x54] sm:$0x1]
  %v346 = vld [vmem:[#allocation3 + $0x55] sm:$0x1]
  %v347 = vld [vmem:[#allocation3 + $0x56] sm:$0x1]
  %v348 = vld [vmem:[#allocation3 + $0x57] sm:$0x1]
  %v349 = vld [vmem:[#allocation3 + $0x58] sm:$0x1]
  %v350 = vld [vmem:[#allocation3 + $0x59] sm:$0x1]
  %v351 = vld [vmem:[#allocation3 + $0x5a] sm:$0x1]
  %v352 = vld [vmem:[#allocation3 + $0x5b] sm:$0x1]
  %v353 = vld [vmem:[#allocation3 + $0x5c] sm:$0x1]
  %v354 = vld [vmem:[#allocation3 + $0x5d] sm:$0x1]
  %v355 = vld [vmem:[#allocation3 + $0x5e] sm:$0x1]
  %v356 = vld [vmem:[#allocation3 + $0x5f] sm:$0x1]
  %v357 = vld [vmem:[#allocation3 + $0x60] sm:$0x1]
  %v358 = vld [vmem:[#allocation3 + $0x61] sm:$0x1]
  %v359 = vld [vmem:[#allocation3 + $0x62] sm:$0x1]
  %v360 = vld [vmem:[#allocation3 + $0x63] sm:$0x1]
  %v361 = vld [vmem:[#allocation3 + $0x64] sm:$0x1]
  %v362 = vld [vmem:[#allocation3 + $0x65] sm:$0x1]
  %v363 = vld [vmem:[#allocation3 + $0x66] sm:$0x1]
  %v364 = vld [vmem:[#allocation3 + $0x67] sm:$0x1]
  %v365 = vld [vmem:[#allocation3 + $0x68] sm:$0x1]
  %v366 = vld [vmem:[#allocation3 + $0x69] sm:$0x1]
  %v367 = vld [vmem:[#allocation3 + $0x6a] sm:$0x1]
  %v368 = vld [vmem:[#allocation3 + $0x6b] sm:$0x1]
  %v369 = vld [vmem:[#allocation3 + $0x6c] sm:$0x1]
  %v370 = vld [vmem:[#allocation3 + $0x6d] sm:$0x1]
  %v371 = vld [vmem:[#allocation3 + $0x6e] sm:$0x1]
  %v372 = vld [vmem:[#allocation3 + $0x6f] sm:$0x1]
  %v373 = vld [vmem:[#allocation3 + $0x70] sm:$0x1]
  %v374 = vld [vmem:[#allocation3 + $0x71] sm:$0x1]
  %v375 = vld [vmem:[#allocation3 + $0x72] sm:$0x1]
  %v376 = vld [vmem:[#allocation3 + $0x73] sm:$0x1]
  %v377 = vld [vmem:[#allocation3 + $0x74] sm:$0x1]
  %v378 = vld [vmem:[#allocation3 + $0x75] sm:$0x1]
  %v379 = vld [vmem:[#allocation3 + $0x76] sm:$0x1]
  %v380 = vld [vmem:[#allocation3 + $0x77] sm:$0x1]
  %v381 = vld [vmem:[#allocation3 + $0x78] sm:$0x1]
  %v382 = vld [vmem:[#allocation3 + $0x79] sm:$0x1]
  %v383 = vld [vmem:[#allocation3 + $0x7a] sm:$0x1]
  %v384 = vld [vmem:[#allocation3 + $0x7b] sm:$0x1]
  %v385 = vld [vmem:[#allocation3 + $0x7c] sm:$0x1]
  %v386 = vld [vmem:[#allocation3 + $0x7d] sm:$0x1]
  %v387 = vld [vmem:[#allocation3 + $0x7e] sm:$0x1]
  %v388 = vld [vmem:[#allocation3 + $0x7f] sm:$0x1]
  %v389 = vmul.f32 %v133, %v261
  %v390 = vmul.f32 %v134, %v262
  %v391 = vmul.f32 %v135, %v263
  %v392 = vmul.f32 %v136, %v264
  %v393 = vmul.f32 %v137, %v265
  %v394 = vmul.f32 %v138, %v266
  %v395 = vmul.f32 %v139, %v267
  %v396 = vmul.f32 %v140, %v268
  %v397 = vmul.f32 %v141, %v269
  %v398 = vmul.f32 %v142, %v270
  %v399 = vmul.f32 %v143, %v271
  %v400 = vmul.f32 %v144, %v272
  %v401 = vmul.f32 %v145, %v273
  %v402 = vmul.f32 %v146, %v274
  %v403 = vmul.f32 %v147, %v275
  %v404 = vmul.f32 %v148, %v276
  %v405 = vmul.f32 %v149, %v277
  %v406 = vmul.f32 %v150, %v278
  %v407 = vmul.f32 %v151, %v279
  %v408 = vmul.f32 %v152, %v280
  %v409 = vmul.f32 %v153, %v281
  %v410 = vmul.f32 %v154, %v282
  %v411 = vmul.f32 %v155, %v283
  %v412 = vmul.f32 %v156, %v284
  %v413 = vmul.f32 %v157, %v285
  %v414 = vmul.f32 %v158, %v286
  %v415 = vmul.f32 %v159, %v287
  %v416 = vmul.f32 %v160, %v288
  %v417 = vmul.f32 %v161, %v289
  %v418 = vmul.f32 %v162, %v290
  %v419 = vmul.f32 %v163, %v291
  %v420 = vmul.f32 %v164, %v292
  %v421 = vmul.f32 %v165, %v293
  %v422 = vmul.f32 %v166, %v294
  %v423 = vmul.f32 %v167, %v295
  %v424 = vmul.f32 %v168, %v296
  %v425 = vmul.f32 %v169, %v297
  %v426 = vmul.f32 %v170, %v298
  %v427 = vmul.f32 %v171, %v299
  %v428 = vmul.f32 %v172, %v300
  %v429 = vmul.f32 %v173, %v301
  %v430 = vmul.f32 %v174, %v302
  %v431 = vmul.f32 %v175, %v303
  %v432 = vmul.f32 %v176, %v304
  %v433 = vmul.f32 %v177, %v305
  %v434 = vmul.f32 %v178, %v306
  %v435 = vmul.f32 %v179, %v307
  %v436 = vmul.f32 %v180, %v308
  %v437 = vmul.f32 %v181, %v309
  %v438 = vmul.f32 %v182, %v310
  %v439 = vmul.f32 %v183, %v311
  %v440 = vmul.f32 %v184, %v312
  %v441 = vmul.f32 %v185, %v313
  %v442 = vmul.f32 %v186, %v314
  %v443 = vmul.f32 %v187, %v315
  %v444 = vmul.f32 %v188, %v316
  %v445 = vmul.f32 %v189, %v317
  %v446 = vmul.f32 %v190, %v318
  %v447 = vmul.f32 %v191, %v319
  %v448 = vmul.f32 %v192, %v320
  %v449 = vmul.f32 %v193, %v321
  %v450 = vmul.f32 %v194, %v322
  %v451 = vmul.f32 %v195, %v323
  %v452 = vmul.f32 %v196, %v324
  %v453 = vmul.f32 %v197, %v325
  %v454 = vmul.f32 %v198, %v326
  %v455 = vmul.f32 %v199, %v327
  %v456 = vmul.f32 %v200, %v328
  %v457 = vmul.f32 %v201, %v329
  %v458 = vmul.f32 %v202, %v330
  %v459 = vmul.f32 %v203, %v331
  %v460 = vmul.f32 %v204, %v332
  %v461 = vmul.f32 %v205, %v333
  %v462 = vmul.f32 %v206, %v334
  %v463 = vmul.f32 %v207, %v335
  %v464 = vmul.f32 %v208, %v336
  %v465 = vmul.f32 %v209, %v337
  %v466 = vmul.f32 %v210, %v338
  %v467 = vmul.f32 %v211, %v339
  %v468 = vmul.f32 %v212, %v340
  %v469 = vmul.f32 %v213, %v341
  %v470 = vmul.f32 %v214, %v342
  %v471 = vmul.f32 %v215, %v343
  %v472 = vmul.f32 %v216, %v344
  %v473 = vmul.f32 %v217, %v345
  %v474 = vmul.f32 %v218, %v346
  %v475 = vmul.f32 %v219, %v347
  %v476 = vmul.f32 %v220, %v348
  %v477 = vmul.f32 %v221, %v349
  %v478 = vmul.f32 %v222, %v350
  %v479 = vmul.f32 %v223, %v351
  %v480 = vmul.f32 %v224, %v352
  %v481 = vmul.f32 %v225, %v353
  %v482 = vmul.f32 %v226, %v354
  %v483 = vmul.f32 %v227, %v355
  %v484 = vmul.f32 %v228, %v356
  %v485 = vmul.f32 %v229, %v357
  %v486 = vmul.f32 %v230, %v358
  %v487 = vmul.f32 %v231, %v359
  %v488 = vmul.f32 %v232, %v360
  %v489 = vmul.f32 %v233, %v361
  %v490 = vmul.f32 %v234, %v362
  %v491 = vmul.f32 %v235, %v363
  %v492 = vmul.f32 %v236, %v364
  %v493 = vmul.f32 %v237, %v365
  %v494 = vmul.f32 %v238, %v366
  %v495 = vmul.f32 %v239, %v367
  %v496 = vmul.f32 %v240, %v368
  %v497 = vmul.f32 %v241, %v369
  %v498 = vmul.f32 %v242, %v370
  %v499 = vmul.f32 %v243, %v371
  %v500 = vmul.f32 %v244, %v372
  %v501 = vmul.f32 %v245, %v373
  %v502 = vmul.f32 %v246, %v374
  %v503 = vmul.f32 %v247, %v375
  %v504 = vmul.f32 %v248, %v376
  %v505 = vmul.f32 %v249, %v377
  %v506 = vmul.f32 %v250, %v378
  %v507 = vmul.f32 %v251, %v379
  %v508 = vmul.f32 %v252, %v380
  %v509 = vmul.f32 %v253, %v381
  %v510 = vmul.f32 %v254, %v382
  %v511 = vmul.f32 %v255, %v383
  %v512 = vmul.f32 %v256, %v384
  %v513 = vmul.f32 %v257, %v385
  %v514 = vmul.f32 %v258, %v386
  %v515 = vmul.f32 %v259, %v387
  %v516 = vmul.f32 %v260, %v388
  %vm517 = vcmask 1040384
  %v518 = vsel %vm517, %v389, 0.0
  %519 = vadd.xlane.f32.xlu0 %v518
  %v520 = vpop.xlane.xlu0 %519
  %v521 = vsel %vm517, %v390, 0.0
  %522 = vadd.xlane.f32.xlu0 %v521
  %v523 = vpop.xlane.xlu0 %522
  %v524 = vsel %vm517, %v391, 0.0
  %525 = vadd.xlane.f32.xlu0 %v524
  %v526 = vpop.xlane.xlu0 %525
  %v527 = vsel %vm517, %v392, 0.0
  %528 = vadd.xlane.f32.xlu0 %v527
  %v529 = vpop.xlane.xlu0 %528
  %v530 = vsel %vm517, %v393, 0.0
  %531 = vadd.xlane.f32.xlu0 %v530
  %v532 = vpop.xlane.xlu0 %531
  %v533 = vsel %vm517, %v394, 0.0
  %534 = vadd.xlane.f32.xlu0 %v533
  %v535 = vpop.xlane.xlu0 %534
  %v536 = vsel %vm517, %v395, 0.0
  %537 = vadd.xlane.f32.xlu0 %v536
  %v538 = vpop.xlane.xlu0 %537
  %v539 = vsel %vm517, %v396, 0.0
  %540 = vadd.xlane.f32.xlu0 %v539
  %v541 = vpop.xlane.xlu0 %540
  %v542 = vsel %vm517, %v397, 0.0
  %543 = vadd.xlane.f32.xlu0 %v542
  %v544 = vpop.xlane.xlu0 %543
  %v545 = vsel %vm517, %v398, 0.0
  %546 = vadd.xlane.f32.xlu0 %v545
  %v547 = vpop.xlane.xlu0 %546
  %v548 = vsel %vm517, %v399, 0.0
  %549 = vadd.xlane.f32.xlu0 %v548
  %v550 = vpop.xlane.xlu0 %549
  %v551 = vsel %vm517, %v400, 0.0
  %552 = vadd.xlane.f32.xlu0 %v551
  %v553 = vpop.xlane.xlu0 %552
  %v554 = vsel %vm517, %v401, 0.0
  %555 = vadd.xlane.f32.xlu0 %v554
  %v556 = vpop.xlane.xlu0 %555
  %v557 = vsel %vm517, %v402, 0.0
  %558 = vadd.xlane.f32.xlu0 %v557
  %v559 = vpop.xlane.xlu0 %558
  %v560 = vsel %vm517, %v403, 0.0
  %561 = vadd.xlane.f32.xlu0 %v560
  %v562 = vpop.xlane.xlu0 %561
  %v563 = vsel %vm517, %v404, 0.0
  %564 = vadd.xlane.f32.xlu0 %v563
  %v565 = vpop.xlane.xlu0 %564
  %v566 = vsel %vm517, %v405, 0.0
  %567 = vadd.xlane.f32.xlu0 %v566
  %v568 = vpop.xlane.xlu0 %567
  %v569 = vsel %vm517, %v406, 0.0
  %570 = vadd.xlane.f32.xlu0 %v569
  %v571 = vpop.xlane.xlu0 %570
  %v572 = vsel %vm517, %v407, 0.0
  %573 = vadd.xlane.f32.xlu0 %v572
  %v574 = vpop.xlane.xlu0 %573
  %v575 = vsel %vm517, %v408, 0.0
  %576 = vadd.xlane.f32.xlu0 %v575
  %v577 = vpop.xlane.xlu0 %576
  %v578 = vsel %vm517, %v409, 0.0
  %579 = vadd.xlane.f32.xlu0 %v578
  %v580 = vpop.xlane.xlu0 %579
  %v581 = vsel %vm517, %v410, 0.0
  %582 = vadd.xlane.f32.xlu0 %v581
  %v583 = vpop.xlane.xlu0 %582
  %v584 = vsel %vm517, %v411, 0.0
  %585 = vadd.xlane.f32.xlu0 %v584
  %v586 = vpop.xlane.xlu0 %585
  %v587 = vsel %vm517, %v412, 0.0
  %588 = vadd.xlane.f32.xlu0 %v587
  %v589 = vpop.xlane.xlu0 %588
  %v590 = vsel %vm517, %v413, 0.0
  %591 = vadd.xlane.f32.xlu0 %v590
  %v592 = vpop.xlane.xlu0 %591
  %v593 = vsel %vm517, %v414, 0.0
  %594 = vadd.xlane.f32.xlu0 %v593
  %v595 = vpop.xlane.xlu0 %594
  %v596 = vsel %vm517, %v415, 0.0
  %597 = vadd.xlane.f32.xlu0 %v596
  %v598 = vpop.xlane.xlu0 %597
  %v599 = vsel %vm517, %v416, 0.0
  %600 = vadd.xlane.f32.xlu0 %v599
  %v601 = vpop.xlane.xlu0 %600
  %v602 = vsel %vm517, %v417, 0.0
  %603 = vadd.xlane.f32.xlu0 %v602
  %v604 = vpop.xlane.xlu0 %603
  %v605 = vsel %vm517, %v418, 0.0
  %606 = vadd.xlane.f32.xlu0 %v605
  %v607 = vpop.xlane.xlu0 %606
  %v608 = vsel %vm517, %v419, 0.0
  %609 = vadd.xlane.f32.xlu0 %v608
  %v610 = vpop.xlane.xlu0 %609
  %v611 = vsel %vm517, %v420, 0.0
  %612 = vadd.xlane.f32.xlu0 %v611
  %v613 = vpop.xlane.xlu0 %612
  %v614 = vsel %vm517, %v421, 0.0
  %615 = vadd.xlane.f32.xlu0 %v614
  %v616 = vpop.xlane.xlu0 %615
  %v617 = vsel %vm517, %v422, 0.0
  %618 = vadd.xlane.f32.xlu0 %v617
  %v619 = vpop.xlane.xlu0 %618
  %v620 = vsel %vm517, %v423, 0.0
  %621 = vadd.xlane.f32.xlu0 %v620
  %v622 = vpop.xlane.xlu0 %621
  %v623 = vsel %vm517, %v424, 0.0
  %624 = vadd.xlane.f32.xlu0 %v623
  %v625 = vpop.xlane.xlu0 %624
  %v626 = vsel %vm517, %v425, 0.0
  %627 = vadd.xlane.f32.xlu0 %v626
  %v628 = vpop.xlane.xlu0 %627
  %v629 = vsel %vm517, %v426, 0.0
  %630 = vadd.xlane.f32.xlu0 %v629
  %v631 = vpop.xlane.xlu0 %630
  %v632 = vsel %vm517, %v427, 0.0
  %633 = vadd.xlane.f32.xlu0 %v632
  %v634 = vpop.xlane.xlu0 %633
  %v635 = vsel %vm517, %v428, 0.0
  %636 = vadd.xlane.f32.xlu0 %v635
  %v637 = vpop.xlane.xlu0 %636
  %v638 = vsel %vm517, %v429, 0.0
  %639 = vadd.xlane.f32.xlu0 %v638
  %v640 = vpop.xlane.xlu0 %639
  %v641 = vsel %vm517, %v430, 0.0
  %642 = vadd.xlane.f32.xlu0 %v641
  %v643 = vpop.xlane.xlu0 %642
  %v644 = vsel %vm517, %v431, 0.0
  %645 = vadd.xlane.f32.xlu0 %v644
  %v646 = vpop.xlane.xlu0 %645
  %v647 = vsel %vm517, %v432, 0.0
  %648 = vadd.xlane.f32.xlu0 %v647
  %v649 = vpop.xlane.xlu0 %648
  %v650 = vsel %vm517, %v433, 0.0
  %651 = vadd.xlane.f32.xlu0 %v650
  %v652 = vpop.xlane.xlu0 %651
  %v653 = vsel %vm517, %v434, 0.0
  %654 = vadd.xlane.f32.xlu0 %v653
  %v655 = vpop.xlane.xlu0 %654
  %v656 = vsel %vm517, %v435, 0.0
  %657 = vadd.xlane.f32.xlu0 %v656
  %v658 = vpop.xlane.xlu0 %657
  %v659 = vsel %vm517, %v436, 0.0
  %660 = vadd.xlane.f32.xlu0 %v659
  %v661 = vpop.xlane.xlu0 %660
  %v662 = vsel %vm517, %v437, 0.0
  %663 = vadd.xlane.f32.xlu0 %v662
  %v664 = vpop.xlane.xlu0 %663
  %v665 = vsel %vm517, %v438, 0.0
  %666 = vadd.xlane.f32.xlu0 %v665
  %v667 = vpop.xlane.xlu0 %666
  %v668 = vsel %vm517, %v439, 0.0
  %669 = vadd.xlane.f32.xlu0 %v668
  %v670 = vpop.xlane.xlu0 %669
  %v671 = vsel %vm517, %v440, 0.0
  %672 = vadd.xlane.f32.xlu0 %v671
  %v673 = vpop.xlane.xlu0 %672
  %v674 = vsel %vm517, %v441, 0.0
  %675 = vadd.xlane.f32.xlu0 %v674
  %v676 = vpop.xlane.xlu0 %675
  %v677 = vsel %vm517, %v442, 0.0
  %678 = vadd.xlane.f32.xlu0 %v677
  %v679 = vpop.xlane.xlu0 %678
  %v680 = vsel %vm517, %v443, 0.0
  %681 = vadd.xlane.f32.xlu0 %v680
  %v682 = vpop.xlane.xlu0 %681
  %v683 = vsel %vm517, %v444, 0.0
  %684 = vadd.xlane.f32.xlu0 %v683
  %v685 = vpop.xlane.xlu0 %684
  %v686 = vsel %vm517, %v445, 0.0
  %687 = vadd.xlane.f32.xlu0 %v686
  %v688 = vpop.xlane.xlu0 %687
  %v689 = vsel %vm517, %v446, 0.0
  %690 = vadd.xlane.f32.xlu0 %v689
  %v691 = vpop.xlane.xlu0 %690
  %v692 = vsel %vm517, %v447, 0.0
  %693 = vadd.xlane.f32.xlu0 %v692
  %v694 = vpop.xlane.xlu0 %693
  %v695 = vsel %vm517, %v448, 0.0
  %696 = vadd.xlane.f32.xlu0 %v695
  %v697 = vpop.xlane.xlu0 %696
  %v698 = vsel %vm517, %v449, 0.0
  %699 = vadd.xlane.f32.xlu0 %v698
  %v700 = vpop.xlane.xlu0 %699
  %v701 = vsel %vm517, %v450, 0.0
  %702 = vadd.xlane.f32.xlu0 %v701
  %v703 = vpop.xlane.xlu0 %702
  %v704 = vsel %vm517, %v451, 0.0
  %705 = vadd.xlane.f32.xlu0 %v704
  %v706 = vpop.xlane.xlu0 %705
  %v707 = vsel %vm517, %v452, 0.0
  %708 = vadd.xlane.f32.xlu0 %v707
  %v709 = vpop.xlane.xlu0 %708
  %v710 = vsel %vm517, %v453, 0.0
  %711 = vadd.xlane.f32.xlu0 %v710
  %v712 = vpop.xlane.xlu0 %711
  %v713 = vsel %vm517, %v454, 0.0
  %714 = vadd.xlane.f32.xlu0 %v713
  %v715 = vpop.xlane.xlu0 %714
  %v716 = vsel %vm517, %v455, 0.0
  %717 = vadd.xlane.f32.xlu0 %v716
  %v718 = vpop.xlane.xlu0 %717
  %v719 = vsel %vm517, %v456, 0.0
  %720 = vadd.xlane.f32.xlu0 %v719
  %v721 = vpop.xlane.xlu0 %720
  %v722 = vsel %vm517, %v457, 0.0
  %723 = vadd.xlane.f32.xlu0 %v722
  %v724 = vpop.xlane.xlu0 %723
  %v725 = vsel %vm517, %v458, 0.0
  %726 = vadd.xlane.f32.xlu0 %v725
  %v727 = vpop.xlane.xlu0 %726
  %v728 = vsel %vm517, %v459, 0.0
  %729 = vadd.xlane.f32.xlu0 %v728
  %v730 = vpop.xlane.xlu0 %729
  %v731 = vsel %vm517, %v460, 0.0
  %732 = vadd.xlane.f32.xlu0 %v731
  %v733 = vpop.xlane.xlu0 %732
  %v734 = vsel %vm517, %v461, 0.0
  %735 = vadd.xlane.f32.xlu0 %v734
  %v736 = vpop.xlane.xlu0 %735
  %v737 = vsel %vm517, %v462, 0.0
  %738 = vadd.xlane.f32.xlu0 %v737
  %v739 = vpop.xlane.xlu0 %738
  %v740 = vsel %vm517, %v463, 0.0
  %741 = vadd.xlane.f32.xlu0 %v740
  %v742 = vpop.xlane.xlu0 %741
  %v743 = vsel %vm517, %v464, 0.0
  %744 = vadd.xlane.f32.xlu0 %v743
  %v745 = vpop.xlane.xlu0 %744
  %v746 = vsel %vm517, %v465, 0.0
  %747 = vadd.xlane.f32.xlu0 %v746
  %v748 = vpop.xlane.xlu0 %747
  %v749 = vsel %vm517, %v466, 0.0
  %750 = vadd.xlane.f32.xlu0 %v749
  %v751 = vpop.xlane.xlu0 %750
  %v752 = vsel %vm517, %v467, 0.0
  %753 = vadd.xlane.f32.xlu0 %v752
  %v754 = vpop.xlane.xlu0 %753
  %v755 = vsel %vm517, %v468, 0.0
  %756 = vadd.xlane.f32.xlu0 %v755
  %v757 = vpop.xlane.xlu0 %756
  %v758 = vsel %vm517, %v469, 0.0
  %759 = vadd.xlane.f32.xlu0 %v758
  %v760 = vpop.xlane.xlu0 %759
  %v761 = vsel %vm517, %v470, 0.0
  %762 = vadd.xlane.f32.xlu0 %v761
  %v763 = vpop.xlane.xlu0 %762
  %v764 = vsel %vm517, %v471, 0.0
  %765 = vadd.xlane.f32.xlu0 %v764
  %v766 = vpop.xlane.xlu0 %765
  %v767 = vsel %vm517, %v472, 0.0
  %768 = vadd.xlane.f32.xlu0 %v767
  %v769 = vpop.xlane.xlu0 %768
  %v770 = vsel %vm517, %v473, 0.0
  %771 = vadd.xlane.f32.xlu0 %v770
  %v772 = vpop.xlane.xlu0 %771
  %v773 = vsel %vm517, %v474, 0.0
  %774 = vadd.xlane.f32.xlu0 %v773
  %v775 = vpop.xlane.xlu0 %774
  %v776 = vsel %vm517, %v475, 0.0
  %777 = vadd.xlane.f32.xlu0 %v776
  %v778 = vpop.xlane.xlu0 %777
  %v779 = vsel %vm517, %v476, 0.0
  %780 = vadd.xlane.f32.xlu0 %v779
  %v781 = vpop.xlane.xlu0 %780
  %v782 = vsel %vm517, %v477, 0.0
  %783 = vadd.xlane.f32.xlu0 %v782
  %v784 = vpop.xlane.xlu0 %783
  %v785 = vsel %vm517, %v478, 0.0
  %786 = vadd.xlane.f32.xlu0 %v785
  %v787 = vpop.xlane.xlu0 %786
  %v788 = vsel %vm517, %v479, 0.0
  %789 = vadd.xlane.f32.xlu0 %v788
  %v790 = vpop.xlane.xlu0 %789
  %v791 = vsel %vm517, %v480, 0.0
  %792 = vadd.xlane.f32.xlu0 %v791
  %v793 = vpop.xlane.xlu0 %792
  %v794 = vsel %vm517, %v481, 0.0
  %795 = vadd.xlane.f32.xlu0 %v794
  %v796 = vpop.xlane.xlu0 %795
  %v797 = vsel %vm517, %v482, 0.0
  %798 = vadd.xlane.f32.xlu0 %v797
  %v799 = vpop.xlane.xlu0 %798
  %v800 = vsel %vm517, %v483, 0.0
  %801 = vadd.xlane.f32.xlu0 %v800
  %v802 = vpop.xlane.xlu0 %801
  %v803 = vsel %vm517, %v484, 0.0
  %804 = vadd.xlane.f32.xlu0 %v803
  %v805 = vpop.xlane.xlu0 %804
  %v806 = vsel %vm517, %v485, 0.0
  %807 = vadd.xlane.f32.xlu0 %v806
  %v808 = vpop.xlane.xlu0 %807
  %v809 = vsel %vm517, %v486, 0.0
  %810 = vadd.xlane.f32.xlu0 %v809
  %v811 = vpop.xlane.xlu0 %810
  %v812 = vsel %vm517, %v487, 0.0
  %813 = vadd.xlane.f32.xlu0 %v812
  %v814 = vpop.xlane.xlu0 %813
  %v815 = vsel %vm517, %v488, 0.0
  %816 = vadd.xlane.f32.xlu0 %v815
  %v817 = vpop.xlane.xlu0 %816
  %v818 = vsel %vm517, %v489, 0.0
  %819 = vadd.xlane.f32.xlu0 %v818
  %v820 = vpop.xlane.xlu0 %819
  %v821 = vsel %vm517, %v490, 0.0
  %822 = vadd.xlane.f32.xlu0 %v821
  %v823 = vpop.xlane.xlu0 %822
  %v824 = vsel %vm517, %v491, 0.0
  %825 = vadd.xlane.f32.xlu0 %v824
  %v826 = vpop.xlane.xlu0 %825
  %v827 = vsel %vm517, %v492, 0.0
  %828 = vadd.xlane.f32.xlu0 %v827
  %v829 = vpop.xlane.xlu0 %828
  %v830 = vsel %vm517, %v493, 0.0
  %831 = vadd.xlane.f32.xlu0 %v830
  %v832 = vpop.xlane.xlu0 %831
  %v833 = vsel %vm517, %v494, 0.0
  %834 = vadd.xlane.f32.xlu0 %v833
  %v835 = vpop.xlane.xlu0 %834
  %v836 = vsel %vm517, %v495, 0.0
  %837 = vadd.xlane.f32.xlu0 %v836
  %v838 = vpop.xlane.xlu0 %837
  %v839 = vsel %vm517, %v496, 0.0
  %840 = vadd.xlane.f32.xlu0 %v839
  %v841 = vpop.xlane.xlu0 %840
  %v842 = vsel %vm517, %v497, 0.0
  %843 = vadd.xlane.f32.xlu0 %v842
  %v844 = vpop.xlane.xlu0 %843
  %v845 = vsel %vm517, %v498, 0.0
  %846 = vadd.xlane.f32.xlu0 %v845
  %v847 = vpop.xlane.xlu0 %846
  %v848 = vsel %vm517, %v499, 0.0
  %849 = vadd.xlane.f32.xlu0 %v848
  %v850 = vpop.xlane.xlu0 %849
  %v851 = vsel %vm517, %v500, 0.0
  %852 = vadd.xlane.f32.xlu0 %v851
  %v853 = vpop.xlane.xlu0 %852
  %v854 = vsel %vm517, %v501, 0.0
  %855 = vadd.xlane.f32.xlu0 %v854
  %v856 = vpop.xlane.xlu0 %855
  %v857 = vsel %vm517, %v502, 0.0
  %858 = vadd.xlane.f32.xlu0 %v857
  %v859 = vpop.xlane.xlu0 %858
  %v860 = vsel %vm517, %v503, 0.0
  %861 = vadd.xlane.f32.xlu0 %v860
  %v862 = vpop.xlane.xlu0 %861
  %v863 = vsel %vm517, %v504, 0.0
  %864 = vadd.xlane.f32.xlu0 %v863
  %v865 = vpop.xlane.xlu0 %864
  %v866 = vsel %vm517, %v505, 0.0
  %867 = vadd.xlane.f32.xlu0 %v866
  %v868 = vpop.xlane.xlu0 %867
  %v869 = vsel %vm517, %v506, 0.0
  %870 = vadd.xlane.f32.xlu0 %v869
  %v871 = vpop.xlane.xlu0 %870
  %v872 = vsel %vm517, %v507, 0.0
  %873 = vadd.xlane.f32.xlu0 %v872
  %v874 = vpop.xlane.xlu0 %873
  %v875 = vsel %vm517, %v508, 0.0
  %876 = vadd.xlane.f32.xlu0 %v875
  %v877 = vpop.xlane.xlu0 %876
  %v878 = vsel %vm517, %v509, 0.0
  %879 = vadd.xlane.f32.xlu0 %v878
  %v880 = vpop.xlane.xlu0 %879
  %v881 = vsel %vm517, %v510, 0.0
  %882 = vadd.xlane.f32.xlu0 %v881
  %v883 = vpop.xlane.xlu0 %882
  %v884 = vsel %vm517, %v511, 0.0
  %885 = vadd.xlane.f32.xlu0 %v884
  %v886 = vpop.xlane.xlu0 %885
  %v887 = vsel %vm517, %v512, 0.0
  %888 = vadd.xlane.f32.xlu0 %v887
  %v889 = vpop.xlane.xlu0 %888
  %v890 = vsel %vm517, %v513, 0.0
  %891 = vadd.xlane.f32.xlu0 %v890
  %v892 = vpop.xlane.xlu0 %891
  %v893 = vsel %vm517, %v514, 0.0
  %894 = vadd.xlane.f32.xlu0 %v893
  %v895 = vpop.xlane.xlu0 %894
  %v896 = vsel %vm517, %v515, 0.0
  %897 = vadd.xlane.f32.xlu0 %v896
  %v898 = vpop.xlane.xlu0 %897
  %v899 = vsel %vm517, %v516, 0.0
  %900 = vadd.xlane.f32.xlu0 %v899
  %v901 = vpop.xlane.xlu0 %900
  %v1030 = vrot.slane %v523, 7
  %vm1031 = vcmask 1041409
  %v1032 = vsel %vm1031, %v1030, %v520
  %v1033 = vrot.slane %v526, 6
  %vm1034 = vcmask 1042434
  %v1035 = vsel %vm1034, %v1033, %v1032
  %v1036 = vrot.slane %v529, 5
  %vm1037 = vcmask 1043459
  %v1038 = vsel %vm1037, %v1036, %v1035
  %v1039 = vrot.slane %v532, 4
  %vm1040 = vcmask 1044484
  %v1041 = vsel %vm1040, %v1039, %v1038
  %v1042 = vrot.slane %v535, 3
  %vm1043 = vcmask 1045509
  %v1044 = vsel %vm1043, %v1042, %v1041
  %v1045 = vrot.slane %v538, 2
  %vm1046 = vcmask 1046534
  %v1047 = vsel %vm1046, %v1045, %v1044
  %v1048 = vrot.slane %v541, 1
  %vm1049 = vcmask 1047559
  %v1050 = vsel %vm1049, %v1048, %v1047
  %v1051 = vrot.slane %v547, 7
  %v1052 = vsel %vm1031, %v1051, %v544
  %v1053 = vrot.slane %v550, 6
  %v1054 = vsel %vm1034, %v1053, %v1052
  %v1055 = vrot.slane %v553, 5
  %v1056 = vsel %vm1037, %v1055, %v1054
  %v1057 = vrot.slane %v556, 4
  %v1058 = vsel %vm1040, %v1057, %v1056
  %v1059 = vrot.slane %v559, 3
  %v1060 = vsel %vm1043, %v1059, %v1058
  %v1061 = vrot.slane %v562, 2
  %v1062 = vsel %vm1046, %v1061, %v1060
  %v1063 = vrot.slane %v565, 1
  %v1064 = vsel %vm1049, %v1063, %v1062
  %v1065 = vrot.slane %v571, 7
  %v1066 = vsel %vm1031, %v1065, %v568
  %v1067 = vrot.slane %v574, 6
  %v1068 = vsel %vm1034, %v1067, %v1066
  %v1069 = vrot.slane %v577, 5
  %v1070 = vsel %vm1037, %v1069, %v1068
  %v1071 = vrot.slane %v580, 4
  %v1072 = vsel %vm1040, %v1071, %v1070
  %v1073 = vrot.slane %v583, 3
  %v1074 = vsel %vm1043, %v1073, %v1072
  %v1075 = vrot.slane %v586, 2
  %v1076 = vsel %vm1046, %v1075, %v1074
  %v1077 = vrot.slane %v589, 1
  %v1078 = vsel %vm1049, %v1077, %v1076
  %v1079 = vrot.slane %v595, 7
  %v1080 = vsel %vm1031, %v1079, %v592
  %v1081 = vrot.slane %v598, 6
  %v1082 = vsel %vm1034, %v1081, %v1080
  %v1083 = vrot.slane %v601, 5
  %v1084 = vsel %vm1037, %v1083, %v1082
  %v1085 = vrot.slane %v604, 4
  %v1086 = vsel %vm1040, %v1085, %v1084
  %v1087 = vrot.slane %v607, 3
  %v1088 = vsel %vm1043, %v1087, %v1086
  %v1089 = vrot.slane %v610, 2
  %v1090 = vsel %vm1046, %v1089, %v1088
  %v1091 = vrot.slane %v613, 1
  %v1092 = vsel %vm1049, %v1091, %v1090
  %v1093 = vrot.slane %v619, 7
  %v1094 = vsel %vm1031, %v1093, %v616
  %v1095 = vrot.slane %v622, 6
  %v1096 = vsel %vm1034, %v1095, %v1094
  %v1097 = vrot.slane %v625, 5
  %v1098 = vsel %vm1037, %v1097, %v1096
  %v1099 = vrot.slane %v628, 4
  %v1100 = vsel %vm1040, %v1099, %v1098
  %v1101 = vrot.slane %v631, 3
  %v1102 = vsel %vm1043, %v1101, %v1100
  %v1103 = vrot.slane %v634, 2
  %v1104 = vsel %vm1046, %v1103, %v1102
  %v1105 = vrot.slane %v637, 1
  %v1106 = vsel %vm1049, %v1105, %v1104
  %v1107 = vrot.slane %v643, 7
  %v1108 = vsel %vm1031, %v1107, %v640
  %v1109 = vrot.slane %v646, 6
  %v1110 = vsel %vm1034, %v1109, %v1108
  %v1111 = vrot.slane %v649, 5
  %v1112 = vsel %vm1037, %v1111, %v1110
  %v1113 = vrot.slane %v652, 4
  %v1114 = vsel %vm1040, %v1113, %v1112
  %v1115 = vrot.slane %v655, 3
  %v1116 = vsel %vm1043, %v1115, %v1114
  %v1117 = vrot.slane %v658, 2
  %v1118 = vsel %vm1046, %v1117, %v1116
  %v1119 = vrot.slane %v661, 1
  %v1120 = vsel %vm1049, %v1119, %v1118
  %v1121 = vrot.slane %v667, 7
  %v1122 = vsel %vm1031, %v1121, %v664
  %v1123 = vrot.slane %v670, 6
  %v1124 = vsel %vm1034, %v1123, %v1122
  %v1125 = vrot.slane %v673, 5
  %v1126 = vsel %vm1037, %v1125, %v1124
  %v1127 = vrot.slane %v676, 4
  %v1128 = vsel %vm1040, %v1127, %v1126
  %v1129 = vrot.slane %v679, 3
  %v1130 = vsel %vm1043, %v1129, %v1128
  %v1131 = vrot.slane %v682, 2
  %v1132 = vsel %vm1046, %v1131, %v1130
  %v1133 = vrot.slane %v685, 1
  %v1134 = vsel %vm1049, %v1133, %v1132
  %v1135 = vrot.slane %v691, 7
  %v1136 = vsel %vm1031, %v1135, %v688
  %v1137 = vrot.slane %v694, 6
  %v1138 = vsel %vm1034, %v1137, %v1136
  %v1139 = vrot.slane %v697, 5
  %v1140 = vsel %vm1037, %v1139, %v1138
  %v1141 = vrot.slane %v700, 4
  %v1142 = vsel %vm1040, %v1141, %v1140
  %v1143 = vrot.slane %v703, 3
  %v1144 = vsel %vm1043, %v1143, %v1142
  %v1145 = vrot.slane %v706, 2
  %v1146 = vsel %vm1046, %v1145, %v1144
  %v1147 = vrot.slane %v709, 1
  %v1148 = vsel %vm1049, %v1147, %v1146
  %v1149 = vrot.slane %v715, 7
  %v1150 = vsel %vm1031, %v1149, %v712
  %v1151 = vrot.slane %v718, 6
  %v1152 = vsel %vm1034, %v1151, %v1150
  %v1153 = vrot.slane %v721, 5
  %v1154 = vsel %vm1037, %v1153, %v1152
  %v1155 = vrot.slane %v724, 4
  %v1156 = vsel %vm1040, %v1155, %v1154
  %v1157 = vrot.slane %v727, 3
  %v1158 = vsel %vm1043, %v1157, %v1156
  %v1159 = vrot.slane %v730, 2
  %v1160 = vsel %vm1046, %v1159, %v1158
  %v1161 = vrot.slane %v733, 1
  %v1162 = vsel %vm1049, %v1161, %v1160
  %v1163 = vrot.slane %v739, 7
  %v1164 = vsel %vm1031, %v1163, %v736
  %v1165 = vrot.slane %v742, 6
  %v1166 = vsel %vm1034, %v1165, %v1164
  %v1167 = vrot.slane %v745, 5
  %v1168 = vsel %vm1037, %v1167, %v1166
  %v1169 = vrot.slane %v748, 4
  %v1170 = vsel %vm1040, %v1169, %v1168
  %v1171 = vrot.slane %v751, 3
  %v1172 = vsel %vm1043, %v1171, %v1170
  %v1173 = vrot.slane %v754, 2
  %v1174 = vsel %vm1046, %v1173, %v1172
  %v1175 = vrot.slane %v757, 1
  %v1176 = vsel %vm1049, %v1175, %v1174
  %v1177 = vrot.slane %v763, 7
  %v1178 = vsel %vm1031, %v1177, %v760
  %v1179 = vrot.slane %v766, 6
  %v1180 = vsel %vm1034, %v1179, %v1178
  %v1181 = vrot.slane %v769, 5
  %v1182 = vsel %vm1037, %v1181, %v1180
  %v1183 = vrot.slane %v772, 4
  %v1184 = vsel %vm1040, %v1183, %v1182
  %v1185 = vrot.slane %v775, 3
  %v1186 = vsel %vm1043, %v1185, %v1184
  %v1187 = vrot.slane %v778, 2
  %v1188 = vsel %vm1046, %v1187, %v1186
  %v1189 = vrot.slane %v781, 1
  %v1190 = vsel %vm1049, %v1189, %v1188
  %v1191 = vrot.slane %v787, 7
  %v1192 = vsel %vm1031, %v1191, %v784
  %v1193 = vrot.slane %v790, 6
  %v1194 = vsel %vm1034, %v1193, %v1192
  %v1195 = vrot.slane %v793, 5
  %v1196 = vsel %vm1037, %v1195, %v1194
  %v1197 = vrot.slane %v796, 4
  %v1198 = vsel %vm1040, %v1197, %v1196
  %v1199 = vrot.slane %v799, 3
  %v1200 = vsel %vm1043, %v1199, %v1198
  %v1201 = vrot.slane %v802, 2
  %v1202 = vsel %vm1046, %v1201, %v1200
  %v1203 = vrot.slane %v805, 1
  %v1204 = vsel %vm1049, %v1203, %v1202
  %v1205 = vrot.slane %v811, 7
  %v1206 = vsel %vm1031, %v1205, %v808
  %v1207 = vrot.slane %v814, 6
  %v1208 = vsel %vm1034, %v1207, %v1206
  %v1209 = vrot.slane %v817, 5
  %v1210 = vsel %vm1037, %v1209, %v1208
  %v1211 = vrot.slane %v820, 4
  %v1212 = vsel %vm1040, %v1211, %v1210
  %v1213 = vrot.slane %v823, 3
  %v1214 = vsel %vm1043, %v1213, %v1212
  %v1215 = vrot.slane %v826, 2
  %v1216 = vsel %vm1046, %v1215, %v1214
  %v1217 = vrot.slane %v829, 1
  %v1218 = vsel %vm1049, %v1217, %v1216
  %v1219 = vrot.slane %v835, 7
  %v1220 = vsel %vm1031, %v1219, %v832
  %v1221 = vrot.slane %v838, 6
  %v1222 = vsel %vm1034, %v1221, %v1220
  %v1223 = vrot.slane %v841, 5
  %v1224 = vsel %vm1037, %v1223, %v1222
  %v1225 = vrot.slane %v844, 4
  %v1226 = vsel %vm1040, %v1225, %v1224
  %v1227 = vrot.slane %v847, 3
  %v1228 = vsel %vm1043, %v1227, %v1226
  %v1229 = vrot.slane %v850, 2
  %v1230 = vsel %vm1046, %v1229, %v1228
  %v1231 = vrot.slane %v853, 1
  %v1232 = vsel %vm1049, %v1231, %v1230
  %v1233 = vrot.slane %v859, 7
  %v1234 = vsel %vm1031, %v1233, %v856
  %v1235 = vrot.slane %v862, 6
  %v1236 = vsel %vm1034, %v1235, %v1234
  %v1237 = vrot.slane %v865, 5
  %v1238 = vsel %vm1037, %v1237, %v1236
  %v1239 = vrot.slane %v868, 4
  %v1240 = vsel %vm1040, %v1239, %v1238
  %v1241 = vrot.slane %v871, 3
  %v1242 = vsel %vm1043, %v1241, %v1240
  %v1243 = vrot.slane %v874, 2
  %v1244 = vsel %vm1046, %v1243, %v1242
  %v1245 = vrot.slane %v877, 1
  %v1246 = vsel %vm1049, %v1245, %v1244
  %v1247 = vrot.slane %v883, 7
  %v1248 = vsel %vm1031, %v1247, %v880
  %v1249 = vrot.slane %v886, 6
  %v1250 = vsel %vm1034, %v1249, %v1248
  %v1251 = vrot.slane %v889, 5
  %v1252 = vsel %vm1037, %v1251, %v1250
  %v1253 = vrot.slane %v892, 4
  %v1254 = vsel %vm1040, %v1253, %v1252
  %v1255 = vrot.slane %v895, 3
  %v1256 = vsel %vm1043, %v1255, %v1254
  %v1257 = vrot.slane %v898, 2
  %v1258 = vsel %vm1046, %v1257, %v1256
  %v1259 = vrot.slane %v901, 1
  %v1260 = vsel %vm1049, %v1259, %v1258
  %vm1277 = vcmask 7168
  %1278 = vst.msk [vmem:[%s3] sm:$0xff] %vm1277, %v1050
  %1279 = vst.msk [vmem:[%s3 + $0x8] sm:$0xff] %vm1277, %v1064
  %1280 = vst.msk [vmem:[%s3 + $0x10] sm:$0xff] %vm1277, %v1078
  %1281 = vst.msk [vmem:[%s3 + $0x18] sm:$0xff] %vm1277, %v1092
  %1282 = vst.msk [vmem:[%s3 + $0x20] sm:$0xff] %vm1277, %v1106
  %1283 = vst.msk [vmem:[%s3 + $0x28] sm:$0xff] %vm1277, %v1120
  %1284 = vst.msk [vmem:[%s3 + $0x30] sm:$0xff] %vm1277, %v1134
  %1285 = vst.msk [vmem:[%s3 + $0x38] sm:$0xff] %vm1277, %v1148
  %1286 = vst.msk [vmem:[%s3 + $0x40] sm:$0xff] %vm1277, %v1162
  %1287 = vst.msk [vmem:[%s3 + $0x48] sm:$0xff] %vm1277, %v1176
  %1288 = vst.msk [vmem:[%s3 + $0x50] sm:$0xff] %vm1277, %v1190
  %1289 = vst.msk [vmem:[%s3 + $0x58] sm:$0xff] %vm1277, %v1204
  %1290 = vst.msk [vmem:[%s3 + $0x60] sm:$0xff] %vm1277, %v1218
  %1291 = vst.msk [vmem:[%s3 + $0x68] sm:$0xff] %vm1277, %v1232
  %1292 = vst.msk [vmem:[%s3 + $0x70] sm:$0xff] %vm1277, %v1246
  %1293 = vst.msk [vmem:[%s3 + $0x78] sm:$0xff] %vm1277, %v1260
  // Predicated region
  $region76: #{lightgcn_forward.7} parent=0 // pred_check
    _
  $region77: #{lightgcn_forward.7} parent=0 // pred_check_branch
    %1295 = sbr.rel (0) target = $region79
  $region78: #{lightgcn_forward.7} parent=0 // pred_region
    _
  $region79: #{lightgcn_forward.7} parent=0 // pred_fallthru
    _
  // Predicated region
  $region80: #{lightgcn_forward.7} parent=0 // pred_check
    _
  $region81: #{lightgcn_forward.7} parent=0 // pred_check_branch
    %1297 = sbr.rel (0) target = $region83
  $region82: #{lightgcn_forward.7} parent=0 // pred_region
    _
  $region83: #{lightgcn_forward.7} parent=0 // pred_fallthru
    _
  %1298 = vsyncmov [#allocation4]
  %s1299 = vpop.sfrf %1298
  %p1300 = scmp.eq.s32.totalorder %s1299, 0
  %p1301 = pneg %p1300
  %1303 = shalt.err (%p1301)
  %s1304 = scalar_lea.sflag [#allocation4], 1
  %1305 = vsyncmov %s1304
  %s1306 = vpop.sfrf %1305
  %p1307 = scmp.eq.s32.totalorder %s1306, 0
  %p1308 = pneg %p1307
  %1310 = shalt.err (%p1308)

</llo_original>
